<compile_context>
chip_gen: v6e
topology: v6e:2x2x1
jax: 0.10.0
libtpu: 0.0.40
codegen_flags: <defaults>
</compile_context>

<pallas_src>
import numpy as np
import jax
import jax.numpy as jnp
from jax.experimental import pallas as pl
from jax.experimental.pallas import tpu as pltpu


def _round_up(x, m):
    return -(-x // m) * m


def _dc_kernel(x_ref, km_ref, invm_ref, fh_ref, fwc_ref, fw2_ref, out_ref, a_scr):
    Hp = fh_ref.shape[1]
    Wp = fw2_ref.shape[1]
    bt = x_ref.shape[1] // Wp              # images in this tile (static)

    # ---- stage 1: per-image W-side forward DFT (real -> complex), re|im fused
    fwc = fwc_ref[...]                     # (Wp, 2Wp) = [Fwr | Fwi] / sqrt(W)
    for b in range(bt):                    # static unroll over the batch tile
        sl = slice(b * Wp, (b + 1) * Wp)
        a_b = jnp.dot(x_ref[:, sl], fwc, preferred_element_type=jnp.float32)
        a_scr[0, :, sl] = a_b[:, :Wp]      # Re(X_b @ F_W)
        a_scr[1, :, sl] = a_b[:, Wp:]      # Im(X_b @ F_W)

    fhr = fh_ref[0]                        # Re(F_H) / sqrt(H)
    fhi = fh_ref[1]                        # Im(F_H) / sqrt(H)
    fhs = fh_ref[2]                        # (Re + Im)(F_H)   (fwd Karatsuba)
    fhd = fh_ref[3]                        # (Re - Im)(F_H)   (inv Karatsuba)
    ar = a_scr[0]
    ai = a_scr[1]

    # ---- stage 2: batched H-side forward DFT (complex x complex, Karatsuba),
    #      each matmul is (Hp,Hp) @ (Hp, bt*Wp) -> wide N.
    t1 = jnp.dot(fhr, ar, preferred_element_type=jnp.float32)
    t2 = jnp.dot(fhi, ai, preferred_element_type=jnp.float32)
    t3 = jnp.dot(fhs, ar + ai, preferred_element_type=jnp.float32)
    kpr = t1 - t2                          # Re(F_H @ A)
    kpi = t3 - t1 - t2                     # Im(F_H @ A)

    # ---- data-consistency mix (mask*k and 1-mask precomputed on the host) ----
    invm = invm_ref[...]                   # (Hp, bt*Wp), tiled 1-mask
    ur = km_ref[0] + invm * kpr
    ui = km_ref[1] + invm * kpi

    # ---- stage 3: batched H-side inverse DFT, conj(F_H) @ U (Karatsuba) ------
    p1 = jnp.dot(fhr, ur, preferred_element_type=jnp.float32)
    p2 = jnp.dot(fhi, ui, preferred_element_type=jnp.float32)
    p3 = jnp.dot(fhd, ur + ui, preferred_element_type=jnp.float32)
    tre = p1 + p2                          # Re(conj(F_H) @ U)
    tim = p3 - p1 + p2                     # Im(conj(F_H) @ U)

    # ---- stage 4: per-image W-side inverse DFT, real part only, straight out -
    fwr = fw2_ref[0]
    fwi = fw2_ref[1]
    for b in range(bt):
        sl = slice(b * Wp, (b + 1) * Wp)
        o_b = (jnp.dot(tre[:, sl], fwr, preferred_element_type=jnp.float32)
               + jnp.dot(tim[:, sl], fwi, preferred_element_type=jnp.float32))
        out_ref[:, sl] = o_b.astype(out_ref.dtype)


def _vmem_budget():
    """Per-core VMEM budget + whether the parallel grid axis is sharded over 2 TCs."""
    try:
        cap = int(pltpu.get_tpu_info().vmem_capacity_bytes)
    except Exception:
        cap = 128 * 1024 * 1024
    two_tc = cap <= 80 * 1024 * 1024            # v7x-style: 64 MiB per TensorCore
    budget = int(cap * (0.75 if two_tc else 0.78))   # ~48 MiB v7x, ~100 MiB v5e/v6e
    return budget, two_tc


def _vmem_need_bytes(Hp, Wp, bt):
    blk = Hp * bt * Wp                          # floats in one (Hp, bt*Wp) slab
    pipelined = 2 * 4 * blk                     # img + km(re,im) + out, double-buffered
    consts = 2 * (blk + 4 * Hp * Hp + 4 * Wp * Wp)   # counted twice in case Buffered(1)
                                                     # is not honoured by this backend
    scratch = 2 * blk                           # assembled Re/Im of X @ F_W
    live = 8 * blk                              # wide intermediates in stages 2-3
    return 4 * (pipelined + consts + scratch + live) + (2 << 20)


def _pick_batch_tile(B, Hp, Wp, budget, two_tc):
    bt = B if not two_tc else max(1, -(-B // 2))     # keep grid >= 2 on 2-TC chips
    bt = max(1, min(bt, max(1, 2048 // Wp)))         # N = bt*Wp <= ~2048 saturates MXU
    while bt > 1 and _vmem_need_bytes(Hp, Wp, bt) > budget:
        bt -= 1
    return bt


def data_consistency(predicted_img, us_kspace, us_mask, *, batch_tile=None):
    B, _, H, W = predicted_img.shape
    Hp = _round_up(H, 8)
    Wp = _round_up(W, 128)

    img = predicted_img[:, 0].astype(jnp.float32)            # (B, H, W)
    kr = us_kspace[:, 0, :, :, 0].astype(jnp.float32)
    ki = us_kspace[:, 0, :, :, 1].astype(jnp.float32)
    mask = us_mask[0, :, :, 0].astype(jnp.float32)            # (H, W)

    # Host precompute: mask*kspace and (1 - mask); zero-pad to (Hp, Wp).
    kmr = mask * kr
    kmi = mask * ki
    invm = 1.0 - mask
    pad3 = ((0, 0), (0, Hp - H), (0, Wp - W))
    img = jnp.pad(img, pad3)
    kmr = jnp.pad(kmr, pad3)
    kmi = jnp.pad(kmi, pad3)
    invm = jnp.pad(invm, ((0, Hp - H), (0, Wp - W)))

    budget, two_tc = _vmem_budget()
    bt = _pick_batch_tile(B, Hp, Wp, budget, two_tc) if batch_tile is None \
        else max(1, int(batch_tile))
    grid_len = -(-B // bt)
    Bp = grid_len * bt
    if Bp != B:
        zpad = ((0, Bp - B), (0, 0), (0, 0))
        img = jnp.pad(img, zpad)
        kmr = jnp.pad(kmr, zpad)
        kmi = jnp.pad(kmi, zpad)

    # Column-batched layout: image b occupies lanes [b*Wp, (b+1)*Wp).
    img_cb = jnp.transpose(img, (1, 0, 2)).reshape(Hp, Bp * Wp)
    km_cb = jnp.stack([kmr, kmi], axis=0)                     # (2, Bp, Hp, Wp)
    km_cb = jnp.transpose(km_cb, (0, 2, 1, 3)).reshape(2, Hp, Bp * Wp)
    invm_t = jnp.tile(invm, (1, bt))                          # (Hp, bt*Wp), grid-invariant

    # Host-built, ortho-scaled, zero-embedded DFT matrices + Karatsuba combos.
    nh = np.arange(H)
    nw = np.arange(W)
    fh = np.exp(-2j * np.pi * np.outer(nh, nh) / H) / np.sqrt(H)
    fw = np.exp(-2j * np.pi * np.outer(nw, nw) / W) / np.sqrt(W)
    fhr = np.zeros((Hp, Hp), np.float32); fhr[:H, :H] = fh.real
    fhi = np.zeros((Hp, Hp), np.float32); fhi[:H, :H] = fh.imag
    fwr = np.zeros((Wp, Wp), np.float32); fwr[:W, :W] = fw.real
    fwi = np.zeros((Wp, Wp), np.float32); fwi[:W, :W] = fw.imag
    fh_pack = jnp.asarray(np.stack([fhr, fhi, fhr + fhi, fhr - fhi]), jnp.float32)  # (4,Hp,Hp)
    fw_cat = jnp.asarray(np.concatenate([fwr, fwi], axis=1), jnp.float32)           # (Wp,2Wp)
    fw_pair = jnp.asarray(np.stack([fwr, fwi]), jnp.float32)                        # (2,Wp,Wp)

    vmem_limit = int(min(budget, max(_vmem_need_bytes(Hp, Wp, bt), 32 * 1024 * 1024)))

    macs = grid_len * bt * Hp * Wp * (4 * Wp + 6 * Hp)
    cost = pl.CostEstimate(
        flops=2 * macs,
        transcendentals=0,
        bytes_accessed=4 * (4 * Hp * Bp * Wp + Hp * bt * Wp + 4 * Hp * Hp + 4 * Wp * Wp),
    )

    def build(single_buffer_consts):
        ckw = dict(pipeline_mode=pl.Buffered(1)) if single_buffer_consts else {}
        return pl.pallas_call(
            _dc_kernel,
            out_shape=jax.ShapeDtypeStruct((Hp, Bp * Wp), jnp.float32),
            grid_spec=pltpu.PrefetchScalarGridSpec(
                num_scalar_prefetch=0,
                grid=(grid_len,),
                in_specs=[
                    pl.BlockSpec((Hp, bt * Wp), lambda i: (0, i)),          # image slab
                    pl.BlockSpec((2, Hp, bt * Wp), lambda i: (0, 0, i)),    # masked k-space
                    pl.BlockSpec((Hp, bt * Wp), lambda i: (0, 0), **ckw),   # 1 - mask (tiled)
                    pl.BlockSpec((4, Hp, Hp), lambda i: (0, 0, 0), **ckw),  # F_H pack
                    pl.BlockSpec((Wp, 2 * Wp), lambda i: (0, 0), **ckw),    # [Fwr|Fwi]
                    pl.BlockSpec((2, Wp, Wp), lambda i: (0, 0, 0), **ckw),  # Fwr, Fwi
                ],
                out_specs=pl.BlockSpec((Hp, bt * Wp), lambda i: (0, i)),
                scratch_shapes=[pltpu.VMEM((2, Hp, bt * Wp), jnp.float32)],
            ),
            compiler_params=pltpu.CompilerParams(
                dimension_semantics=("parallel",),
                vmem_limit_bytes=vmem_limit),
            input_output_aliases={0: 0},
            cost_estimate=cost,
        )

    args = (img_cb, km_cb, invm_t, fh_pack, fw_cat, fw_pair)
    try:
        out_cb = build(True)(*args)
    except Exception:
        # pipeline_mode=pl.Buffered(1) not supported by this backend/version:
        # fall back to default double-buffered constants (identical results).
        out_cb = build(False)(*args)

    out = out_cb.reshape(Hp, Bp, Wp).transpose(1, 0, 2)[:B, :H, :W]
    return out[:, None, :, :]


def _reference(predicted_img, us_kspace, us_mask):
    # Pure-JAX reference of the PyTorch forward (float32).
    img = predicted_img[:, 0]
    kp = jnp.fft.fft2(img, norm="ortho")
    kmeas = us_kspace[:, 0, :, :, 0] + 1j * us_kspace[:, 0, :, :, 1]
    m = us_mask[0, :, :, 0]
    upd = m * kmeas + (1.0 - m) * kp
    x = jnp.fft.ifft2(upd, norm="ortho")
    return jnp.real(x)[:, None, :, :].astype(jnp.float32)


if __name__ == "__main__":
    B, H, W = 2, 16, 16
    key = jax.random.PRNGKey(0)
    k1, k2 = jax.random.split(key)

    predicted_img = jax.random.normal(k1, (B, 1, H, W), dtype=jnp.float32)
    us_kspace = jax.random.normal(k2, (B, 1, H, W, 2), dtype=jnp.float32)
    # Deterministic undersampling mask: keep every other column + center lines.
    cols = (np.arange(W) % 2 == 0) | (np.abs(np.arange(W) - W // 2) <= 2)
    us_mask = jnp.asarray(
        np.broadcast_to(cols[None, None, :, None], (1, H, W, 1)).astype(np.float32))

    out = data_consistency(predicted_img, us_kspace, us_mask)
    out = jax.block_until_ready(out)

    ref = _reference(predicted_img, us_kspace, us_mask)
    assert out.shape == (B, 1, H, W) and out.dtype == jnp.float32
    np.testing.assert_allclose(np.asarray(out), np.asarray(ref),
                               rtol=5e-4, atol=5e-4)
    print("KERNEL_OK")
</pallas_src>

<mosaic_0001>
module attributes {stable_mosaic.version = 11 : i64} {
  func.func @_dc_kernel(%arg0: i32, %arg1: memref<16x256xf32, #tpu.memory_space<vmem>>, %arg2: memref<2x16x256xf32, #tpu.memory_space<vmem>>, %arg3: memref<16x256xf32, #tpu.memory_space<vmem>>, %arg4: memref<4x16x16xf32, #tpu.memory_space<vmem>>, %arg5: memref<128x256xf32, #tpu.memory_space<vmem>>, %arg6: memref<2x128x128xf32, #tpu.memory_space<vmem>>, %arg7: memref<16x256xf32, #tpu.memory_space<vmem>>, %arg8: memref<2x16x256xf32, #tpu.memory_space<vmem>>) attributes {dimension_semantics = [#tpu.dimension_semantics<parallel>], iteration_bounds = array<i64: 1>, scalar_prefetch = 0 : i64, scratch_operands = 1 : i64, tpu.core_type = #tpu.core_type<tc>, window_params = [{transform_indices = @transform_0, window_bounds = array<i64: 16, 256>}, {transform_indices = @transform_1, window_bounds = array<i64: 2, 16, 256>}, {pipeline_mode = #tpu.pipeline_mode<synchronous>, transform_indices = @transform_2, window_bounds = array<i64: 16, 256>}, {pipeline_mode = #tpu.pipeline_mode<synchronous>, transform_indices = @transform_3, window_bounds = array<i64: 4, 16, 16>}, {pipeline_mode = #tpu.pipeline_mode<synchronous>, transform_indices = @transform_4, window_bounds = array<i64: 128, 256>}, {pipeline_mode = #tpu.pipeline_mode<synchronous>, transform_indices = @transform_5, window_bounds = array<i64: 2, 128, 128>}, {transform_indices = @transform_6, window_bounds = array<i64: 16, 256>}]} {
    %c0 = arith.constant 0 : index
    %c0_0 = arith.constant 0 : index
    %0 = vector.load %arg5[%c0, %c0_0] : memref<128x256xf32, #tpu.memory_space<vmem>>, vector<128x256xf32>
    %c0_1 = arith.constant 0 : index
    %c0_2 = arith.constant 0 : index
    %1 = vector.load %arg1[%c0_1, %c0_2] : memref<16x256xf32, #tpu.memory_space<vmem>>, vector<16x128xf32>
    %cst = arith.constant dense<0.000000e+00> : vector<16x256xf32>
    %2 = tpu.matmul %1, %0, %cst {dimension_numbers = #tpu.dot_dimension_numbers<[1], [0], [0], [1], [0, 0, 1, 1], [], []>} : vector<16x128xf32>, vector<128x256xf32>, vector<16x256xf32> -> vector<16x256xf32>
    %3 = vector.extract_strided_slice %2 {offsets = [0, 0], sizes = [16, 128], strides = [1, 1]} : vector<16x256xf32> to vector<16x128xf32>
    %c0_3 = arith.constant 0 : index
    %c0_4 = arith.constant 0 : index
    %c0_5 = arith.constant 0 : index
    %4 = vector.load %arg8[%c0_3, %c0_4, %c0_5] : memref<2x16x256xf32, #tpu.memory_space<vmem>>, vector<1x16x128xf32>
    %5 = vector.shape_cast %4 : vector<1x16x128xf32> to vector<16x128xf32>
    %6 = vector.shape_cast %3 : vector<16x128xf32> to vector<1x16x128xf32>
    tpu.vector_store %arg8[%c0_3, %c0_4, %c0_5], %6 {strides = array<i32>} : memref<2x16x256xf32, #tpu.memory_space<vmem>>, vector<1x16x128xf32>,
    %7 = vector.extract_strided_slice %2 {offsets = [0, 128], sizes = [16, 128], strides = [1, 1]} : vector<16x256xf32> to vector<16x128xf32>
    %c1 = arith.constant 1 : index
    %c0_6 = arith.constant 0 : index
    %c0_7 = arith.constant 0 : index
    %8 = vector.load %arg8[%c1, %c0_6, %c0_7] : memref<2x16x256xf32, #tpu.memory_space<vmem>>, vector<1x16x128xf32>
    %9 = vector.shape_cast %8 : vector<1x16x128xf32> to vector<16x128xf32>
    %10 = vector.shape_cast %7 : vector<16x128xf32> to vector<1x16x128xf32>
    tpu.vector_store %arg8[%c1, %c0_6, %c0_7], %10 {strides = array<i32>} : memref<2x16x256xf32, #tpu.memory_space<vmem>>, vector<1x16x128xf32>,
    %c0_8 = arith.constant 0 : index
    %c128 = arith.constant 128 : index
    %11 = vector.load %arg1[%c0_8, %c128] : memref<16x256xf32, #tpu.memory_space<vmem>>, vector<16x128xf32>
    %cst_9 = arith.constant dense<0.000000e+00> : vector<16x256xf32>
    %12 = tpu.matmul %11, %0, %cst_9 {dimension_numbers = #tpu.dot_dimension_numbers<[1], [0], [0], [1], [0, 0, 1, 1], [], []>} : vector<16x128xf32>, vector<128x256xf32>, vector<16x256xf32> -> vector<16x256xf32>
    %13 = vector.extract_strided_slice %12 {offsets = [0, 0], sizes = [16, 128], strides = [1, 1]} : vector<16x256xf32> to vector<16x128xf32>
    %c0_10 = arith.constant 0 : index
    %c0_11 = arith.constant 0 : index
    %c128_12 = arith.constant 128 : index
    %14 = vector.load %arg8[%c0_10, %c0_11, %c128_12] : memref<2x16x256xf32, #tpu.memory_space<vmem>>, vector<1x16x128xf32>
    %15 = vector.shape_cast %14 : vector<1x16x128xf32> to vector<16x128xf32>
    %16 = vector.shape_cast %13 : vector<16x128xf32> to vector<1x16x128xf32>
    tpu.vector_store %arg8[%c0_10, %c0_11, %c128_12], %16 {strides = array<i32>} : memref<2x16x256xf32, #tpu.memory_space<vmem>>, vector<1x16x128xf32>,
    %17 = vector.extract_strided_slice %12 {offsets = [0, 128], sizes = [16, 128], strides = [1, 1]} : vector<16x256xf32> to vector<16x128xf32>
    %c1_13 = arith.constant 1 : index
    %c0_14 = arith.constant 0 : index
    %c128_15 = arith.constant 128 : index
    %18 = vector.load %arg8[%c1_13, %c0_14, %c128_15] : memref<2x16x256xf32, #tpu.memory_space<vmem>>, vector<1x16x128xf32>
    %19 = vector.shape_cast %18 : vector<1x16x128xf32> to vector<16x128xf32>
    %20 = vector.shape_cast %17 : vector<16x128xf32> to vector<1x16x128xf32>
    tpu.vector_store %arg8[%c1_13, %c0_14, %c128_15], %20 {strides = array<i32>} : memref<2x16x256xf32, #tpu.memory_space<vmem>>, vector<1x16x128xf32>,
    %c0_16 = arith.constant 0 : index
    %c0_17 = arith.constant 0 : index
    %c0_18 = arith.constant 0 : index
    %21 = vector.load %arg4[%c0_16, %c0_17, %c0_18] : memref<4x16x16xf32, #tpu.memory_space<vmem>>, vector<1x16x16xf32>
    %22 = vector.shape_cast %21 : vector<1x16x16xf32> to vector<16x16xf32>
    %c1_19 = arith.constant 1 : index
    %c0_20 = arith.constant 0 : index
    %c0_21 = arith.constant 0 : index
    %23 = vector.load %arg4[%c1_19, %c0_20, %c0_21] : memref<4x16x16xf32, #tpu.memory_space<vmem>>, vector<1x16x16xf32>
    %24 = vector.shape_cast %23 : vector<1x16x16xf32> to vector<16x16xf32>
    %c2 = arith.constant 2 : index
    %c0_22 = arith.constant 0 : index
    %c0_23 = arith.constant 0 : index
    %25 = vector.load %arg4[%c2, %c0_22, %c0_23] : memref<4x16x16xf32, #tpu.memory_space<vmem>>, vector<1x16x16xf32>
    %26 = vector.shape_cast %25 : vector<1x16x16xf32> to vector<16x16xf32>
    %c3 = arith.constant 3 : index
    %c0_24 = arith.constant 0 : index
    %c0_25 = arith.constant 0 : index
    %27 = vector.load %arg4[%c3, %c0_24, %c0_25] : memref<4x16x16xf32, #tpu.memory_space<vmem>>, vector<1x16x16xf32>
    %28 = vector.shape_cast %27 : vector<1x16x16xf32> to vector<16x16xf32>
    %c0_26 = arith.constant 0 : index
    %c0_27 = arith.constant 0 : index
    %c0_28 = arith.constant 0 : index
    %29 = vector.load %arg8[%c0_26, %c0_27, %c0_28] : memref<2x16x256xf32, #tpu.memory_space<vmem>>, vector<1x16x256xf32>
    %30 = vector.shape_cast %29 : vector<1x16x256xf32> to vector<16x256xf32>
    %c1_29 = arith.constant 1 : index
    %c0_30 = arith.constant 0 : index
    %c0_31 = arith.constant 0 : index
    %31 = vector.load %arg8[%c1_29, %c0_30, %c0_31] : memref<2x16x256xf32, #tpu.memory_space<vmem>>, vector<1x16x256xf32>
    %32 = vector.shape_cast %31 : vector<1x16x256xf32> to vector<16x256xf32>
    %cst_32 = arith.constant dense<0.000000e+00> : vector<16x256xf32>
    %33 = tpu.matmul %22, %30, %cst_32 {dimension_numbers = #tpu.dot_dimension_numbers<[1], [0], [0], [1], [0, 0, 1, 1], [], []>} : vector<16x16xf32>, vector<16x256xf32>, vector<16x256xf32> -> vector<16x256xf32>
    %cst_33 = arith.constant dense<0.000000e+00> : vector<16x256xf32>
    %34 = tpu.matmul %24, %32, %cst_33 {dimension_numbers = #tpu.dot_dimension_numbers<[1], [0], [0], [1], [0, 0, 1, 1], [], []>} : vector<16x16xf32>, vector<16x256xf32>, vector<16x256xf32> -> vector<16x256xf32>
    %35 = arith.addf %30, %32 : vector<16x256xf32>
    %cst_34 = arith.constant dense<0.000000e+00> : vector<16x256xf32>
    %36 = tpu.matmul %26, %35, %cst_34 {dimension_numbers = #tpu.dot_dimension_numbers<[1], [0], [0], [1], [0, 0, 1, 1], [], []>} : vector<16x16xf32>, vector<16x256xf32>, vector<16x256xf32> -> vector<16x256xf32>
    %37 = arith.subf %33, %34 : vector<16x256xf32>
    %38 = arith.subf %36, %33 : vector<16x256xf32>
    %39 = arith.subf %38, %34 : vector<16x256xf32>
    %c0_35 = arith.constant 0 : index
    %c0_36 = arith.constant 0 : index
    %40 = vector.load %arg3[%c0_35, %c0_36] : memref<16x256xf32, #tpu.memory_space<vmem>>, vector<16x256xf32>
    %c0_37 = arith.constant 0 : index
    %c0_38 = arith.constant 0 : index
    %c0_39 = arith.constant 0 : index
    %41 = vector.load %arg2[%c0_37, %c0_38, %c0_39] : memref<2x16x256xf32, #tpu.memory_space<vmem>>, vector<1x16x256xf32>
    %42 = vector.shape_cast %41 : vector<1x16x256xf32> to vector<16x256xf32>
    %43 = arith.mulf %40, %37 : vector<16x256xf32>
    %44 = arith.addf %42, %43 : vector<16x256xf32>
    %c1_40 = arith.constant 1 : index
    %c0_41 = arith.constant 0 : index
    %c0_42 = arith.constant 0 : index
    %45 = vector.load %arg2[%c1_40, %c0_41, %c0_42] : memref<2x16x256xf32, #tpu.memory_space<vmem>>, vector<1x16x256xf32>
    %46 = vector.shape_cast %45 : vector<1x16x256xf32> to vector<16x256xf32>
    %47 = arith.mulf %40, %39 : vector<16x256xf32>
    %48 = arith.addf %46, %47 : vector<16x256xf32>
    %cst_43 = arith.constant dense<0.000000e+00> : vector<16x256xf32>
    %49 = tpu.matmul %22, %44, %cst_43 {dimension_numbers = #tpu.dot_dimension_numbers<[1], [0], [0], [1], [0, 0, 1, 1], [], []>} : vector<16x16xf32>, vector<16x256xf32>, vector<16x256xf32> -> vector<16x256xf32>
    %cst_44 = arith.constant dense<0.000000e+00> : vector<16x256xf32>
    %50 = tpu.matmul %24, %48, %cst_44 {dimension_numbers = #tpu.dot_dimension_numbers<[1], [0], [0], [1], [0, 0, 1, 1], [], []>} : vector<16x16xf32>, vector<16x256xf32>, vector<16x256xf32> -> vector<16x256xf32>
    %51 = arith.addf %44, %48 : vector<16x256xf32>
    %cst_45 = arith.constant dense<0.000000e+00> : vector<16x256xf32>
    %52 = tpu.matmul %28, %51, %cst_45 {dimension_numbers = #tpu.dot_dimension_numbers<[1], [0], [0], [1], [0, 0, 1, 1], [], []>} : vector<16x16xf32>, vector<16x256xf32>, vector<16x256xf32> -> vector<16x256xf32>
    %53 = arith.addf %49, %50 : vector<16x256xf32>
    %54 = arith.subf %52, %49 : vector<16x256xf32>
    %55 = arith.addf %54, %50 : vector<16x256xf32>
    %c0_46 = arith.constant 0 : index
    %c0_47 = arith.constant 0 : index
    %c0_48 = arith.constant 0 : index
    %56 = vector.load %arg6[%c0_46, %c0_47, %c0_48] : memref<2x128x128xf32, #tpu.memory_space<vmem>>, vector<1x128x128xf32>
    %57 = vector.shape_cast %56 : vector<1x128x128xf32> to vector<128x128xf32>
    %c1_49 = arith.constant 1 : index
    %c0_50 = arith.constant 0 : index
    %c0_51 = arith.constant 0 : index
    %58 = vector.load %arg6[%c1_49, %c0_50, %c0_51] : memref<2x128x128xf32, #tpu.memory_space<vmem>>, vector<1x128x128xf32>
    %59 = vector.shape_cast %58 : vector<1x128x128xf32> to vector<128x128xf32>
    %60 = vector.extract_strided_slice %53 {offsets = [0, 0], sizes = [16, 128], strides = [1, 1]} : vector<16x256xf32> to vector<16x128xf32>
    %cst_52 = arith.constant dense<0.000000e+00> : vector<16x128xf32>
    %61 = tpu.matmul %60, %57, %cst_52 {dimension_numbers = #tpu.dot_dimension_numbers<[1], [0], [0], [1], [0, 0, 1, 1], [], []>} : vector<16x128xf32>, vector<128x128xf32>, vector<16x128xf32> -> vector<16x128xf32>
    %62 = vector.extract_strided_slice %55 {offsets = [0, 0], sizes = [16, 128], strides = [1, 1]} : vector<16x256xf32> to vector<16x128xf32>
    %cst_53 = arith.constant dense<0.000000e+00> : vector<16x128xf32>
    %63 = tpu.matmul %62, %59, %cst_53 {dimension_numbers = #tpu.dot_dimension_numbers<[1], [0], [0], [1], [0, 0, 1, 1], [], []>} : vector<16x128xf32>, vector<128x128xf32>, vector<16x128xf32> -> vector<16x128xf32>
    %64 = arith.addf %61, %63 : vector<16x128xf32>
    %c0_54 = arith.constant 0 : index
    %c0_55 = arith.constant 0 : index
    %65 = vector.load %arg7[%c0_54, %c0_55] : memref<16x256xf32, #tpu.memory_space<vmem>>, vector<16x128xf32>
    tpu.vector_store %arg7[%c0_54, %c0_55], %64 {strides = array<i32>} : memref<16x256xf32, #tpu.memory_space<vmem>>, vector<16x128xf32>,
    %66 = vector.extract_strided_slice %53 {offsets = [0, 128], sizes = [16, 128], strides = [1, 1]} : vector<16x256xf32> to vector<16x128xf32>
    %cst_56 = arith.constant dense<0.000000e+00> : vector<16x128xf32>
    %67 = tpu.matmul %66, %57, %cst_56 {dimension_numbers = #tpu.dot_dimension_numbers<[1], [0], [0], [1], [0, 0, 1, 1], [], []>} : vector<16x128xf32>, vector<128x128xf32>, vector<16x128xf32> -> vector<16x128xf32>
    %68 = vector.extract_strided_slice %55 {offsets = [0, 128], sizes = [16, 128], strides = [1, 1]} : vector<16x256xf32> to vector<16x128xf32>
    %cst_57 = arith.constant dense<0.000000e+00> : vector<16x128xf32>
    %69 = tpu.matmul %68, %59, %cst_57 {dimension_numbers = #tpu.dot_dimension_numbers<[1], [0], [0], [1], [0, 0, 1, 1], [], []>} : vector<16x128xf32>, vector<128x128xf32>, vector<16x128xf32> -> vector<16x128xf32>
    %70 = arith.addf %67, %69 : vector<16x128xf32>
    %c0_58 = arith.constant 0 : index
    %c128_59 = arith.constant 128 : index
    %71 = vector.load %arg7[%c0_58, %c128_59] : memref<16x256xf32, #tpu.memory_space<vmem>>, vector<16x128xf32>
    tpu.vector_store %arg7[%c0_58, %c128_59], %70 {strides = array<i32>} : memref<16x256xf32, #tpu.memory_space<vmem>>, vector<16x128xf32>,
    return
  }
  func.func @transform_0(%arg0: i32) -> (i32, i32) {
    %c0_i32 = arith.constant 0 : i32
    %c0_i32_0 = arith.constant 0 : i32
    return %c0_i32, %arg0 : i32, i32
  }
  func.func @transform_1(%arg0: i32) -> (i32, i32, i32) {
    %c0_i32 = arith.constant 0 : i32
    %c0_i32_0 = arith.constant 0 : i32
    %c0_i32_1 = arith.constant 0 : i32
    return %c0_i32, %c0_i32_0, %arg0 : i32, i32, i32
  }
  func.func @transform_2(%arg0: i32) -> (i32, i32) {
    %c0_i32 = arith.constant 0 : i32
    %c0_i32_0 = arith.constant 0 : i32
    %c0_i32_1 = arith.constant 0 : i32
    return %c0_i32, %c0_i32_0 : i32, i32
  }
  func.func @transform_3(%arg0: i32) -> (i32, i32, i32) {
    %c0_i32 = arith.constant 0 : i32
    %c0_i32_0 = arith.constant 0 : i32
    %c0_i32_1 = arith.constant 0 : i32
    %c0_i32_2 = arith.constant 0 : i32
    return %c0_i32, %c0_i32_0, %c0_i32_1 : i32, i32, i32
  }
  func.func @transform_4(%arg0: i32) -> (i32, i32) {
    %c0_i32 = arith.constant 0 : i32
    %c0_i32_0 = arith.constant 0 : i32
    %c0_i32_1 = arith.constant 0 : i32
    return %c0_i32, %c0_i32_0 : i32, i32
  }
  func.func @transform_5(%arg0: i32) -> (i32, i32, i32) {
    %c0_i32 = arith.constant 0 : i32
    %c0_i32_0 = arith.constant 0 : i32
    %c0_i32_1 = arith.constant 0 : i32
    %c0_i32_2 = arith.constant 0 : i32
    return %c0_i32, %c0_i32_0, %c0_i32_1 : i32, i32, i32
  }
  func.func @transform_6(%arg0: i32) -> (i32, i32) {
    %c0_i32 = arith.constant 0 : i32
    %c0_i32_0 = arith.constant 0 : i32
    return %c0_i32, %arg0 : i32, i32
  }
}

module attributes {stable_mosaic.version = 11 : i64} {
  func.func @_dc_kernel(%arg0: i32, %arg1: memref<16x256xf32, #tpu.memory_space<vmem>>, %arg2: memref<2x16x256xf32, #tpu.memory_space<vmem>>, %arg3: memref<16x256xf32, #tpu.memory_space<vmem>>, %arg4: memref<4x16x16xf32, #tpu.memory_space<vmem>>, %arg5: memref<128x256xf32, #tpu.memory_space<vmem>>, %arg6: memref<2x128x128xf32, #tpu.memory_space<vmem>>, %arg7: memref<16x256xf32, #tpu.memory_space<vmem>>, %arg8: memref<2x16x256xf32, #tpu.memory_space<vmem>>) attributes {dimension_semantics = [#tpu.dimension_semantics<parallel>], iteration_bounds = array<i64: 1>, scalar_prefetch = 0 : i64, scratch_operands = 1 : i64, tpu.core_type = #tpu.core_type<tc>, window_params = [{transform_indices = @transform_0, window_bounds = array<i64: 16, 256>}, {transform_indices = @transform_1, window_bounds = array<i64: 2, 16, 256>}, {pipeline_mode = #tpu.pipeline_mode<synchronous>, transform_indices = @transform_2, window_bounds = array<i64: 16, 256>}, {pipeline_mode = #tpu.pipeline_mode<synchronous>, transform_indices = @transform_3, window_bounds = array<i64: 4, 16, 16>}, {pipeline_mode = #tpu.pipeline_mode<synchronous>, transform_indices = @transform_4, window_bounds = array<i64: 128, 256>}, {pipeline_mode = #tpu.pipeline_mode<synchronous>, transform_indices = @transform_5, window_bounds = array<i64: 2, 128, 128>}, {transform_indices = @transform_6, window_bounds = array<i64: 16, 256>}]} {
    %c0 = arith.constant 0 : index
    %c0_0 = arith.constant 0 : index
    %0 = vector.load %arg5[%c0, %c0_0] : memref<128x256xf32, #tpu.memory_space<vmem>>, vector<128x256xf32>
    %c0_1 = arith.constant 0 : index
    %c0_2 = arith.constant 0 : index
    %1 = vector.load %arg1[%c0_1, %c0_2] : memref<16x256xf32, #tpu.memory_space<vmem>>, vector<16x128xf32>
    %cst = arith.constant dense<0.000000e+00> : vector<16x256xf32>
    %2 = tpu.matmul %1, %0, %cst {dimension_numbers = #tpu.dot_dimension_numbers<[1], [0], [0], [1], [0, 0, 1, 1], [], []>} : vector<16x128xf32>, vector<128x256xf32>, vector<16x256xf32> -> vector<16x256xf32>
    %3 = vector.extract_strided_slice %2 {offsets = [0, 0], sizes = [16, 128], strides = [1, 1]} : vector<16x256xf32> to vector<16x128xf32>
    %c0_3 = arith.constant 0 : index
    %c0_4 = arith.constant 0 : index
    %c0_5 = arith.constant 0 : index
    %4 = vector.load %arg8[%c0_3, %c0_4, %c0_5] : memref<2x16x256xf32, #tpu.memory_space<vmem>>, vector<1x16x128xf32>
    %5 = vector.shape_cast %4 : vector<1x16x128xf32> to vector<16x128xf32>
    %6 = vector.shape_cast %3 : vector<16x128xf32> to vector<1x16x128xf32>
    tpu.vector_store %arg8[%c0_3, %c0_4, %c0_5], %6 {strides = array<i32>} : memref<2x16x256xf32, #tpu.memory_space<vmem>>, vector<1x16x128xf32>,
    %7 = vector.extract_strided_slice %2 {offsets = [0, 128], sizes = [16, 128], strides = [1, 1]} : vector<16x256xf32> to vector<16x128xf32>
    %c1 = arith.constant 1 : index
    %c0_6 = arith.constant 0 : index
    %c0_7 = arith.constant 0 : index
    %8 = vector.load %arg8[%c1, %c0_6, %c0_7] : memref<2x16x256xf32, #tpu.memory_space<vmem>>, vector<1x16x128xf32>
    %9 = vector.shape_cast %8 : vector<1x16x128xf32> to vector<16x128xf32>
    %10 = vector.shape_cast %7 : vector<16x128xf32> to vector<1x16x128xf32>
    tpu.vector_store %arg8[%c1, %c0_6, %c0_7], %10 {strides = array<i32>} : memref<2x16x256xf32, #tpu.memory_space<vmem>>, vector<1x16x128xf32>,
    %c0_8 = arith.constant 0 : index
    %c128 = arith.constant 128 : index
    %11 = vector.load %arg1[%c0_8, %c128] : memref<16x256xf32, #tpu.memory_space<vmem>>, vector<16x128xf32>
    %cst_9 = arith.constant dense<0.000000e+00> : vector<16x256xf32>
    %12 = tpu.matmul %11, %0, %cst_9 {dimension_numbers = #tpu.dot_dimension_numbers<[1], [0], [0], [1], [0, 0, 1, 1], [], []>} : vector<16x128xf32>, vector<128x256xf32>, vector<16x256xf32> -> vector<16x256xf32>
    %13 = vector.extract_strided_slice %12 {offsets = [0, 0], sizes = [16, 128], strides = [1, 1]} : vector<16x256xf32> to vector<16x128xf32>
    %c0_10 = arith.constant 0 : index
    %c0_11 = arith.constant 0 : index
    %c128_12 = arith.constant 128 : index
    %14 = vector.load %arg8[%c0_10, %c0_11, %c128_12] : memref<2x16x256xf32, #tpu.memory_space<vmem>>, vector<1x16x128xf32>
    %15 = vector.shape_cast %14 : vector<1x16x128xf32> to vector<16x128xf32>
    %16 = vector.shape_cast %13 : vector<16x128xf32> to vector<1x16x128xf32>
    tpu.vector_store %arg8[%c0_10, %c0_11, %c128_12], %16 {strides = array<i32>} : memref<2x16x256xf32, #tpu.memory_space<vmem>>, vector<1x16x128xf32>,
    %17 = vector.extract_strided_slice %12 {offsets = [0, 128], sizes = [16, 128], strides = [1, 1]} : vector<16x256xf32> to vector<16x128xf32>
    %c1_13 = arith.constant 1 : index
    %c0_14 = arith.constant 0 : index
    %c128_15 = arith.constant 128 : index
    %18 = vector.load %arg8[%c1_13, %c0_14, %c128_15] : memref<2x16x256xf32, #tpu.memory_space<vmem>>, vector<1x16x128xf32>
    %19 = vector.shape_cast %18 : vector<1x16x128xf32> to vector<16x128xf32>
    %20 = vector.shape_cast %17 : vector<16x128xf32> to vector<1x16x128xf32>
    tpu.vector_store %arg8[%c1_13, %c0_14, %c128_15], %20 {strides = array<i32>} : memref<2x16x256xf32, #tpu.memory_space<vmem>>, vector<1x16x128xf32>,
    %c0_16 = arith.constant 0 : index
    %c0_17 = arith.constant 0 : index
    %c0_18 = arith.constant 0 : index
    %21 = vector.load %arg4[%c0_16, %c0_17, %c0_18] : memref<4x16x16xf32, #tpu.memory_space<vmem>>, vector<1x16x16xf32>
    %22 = vector.shape_cast %21 : vector<1x16x16xf32> to vector<16x16xf32>
    %c1_19 = arith.constant 1 : index
    %c0_20 = arith.constant 0 : index
    %c0_21 = arith.constant 0 : index
    %23 = vector.load %arg4[%c1_19, %c0_20, %c0_21] : memref<4x16x16xf32, #tpu.memory_space<vmem>>, vector<1x16x16xf32>
    %24 = vector.shape_cast %23 : vector<1x16x16xf32> to vector<16x16xf32>
    %c2 = arith.constant 2 : index
    %c0_22 = arith.constant 0 : index
    %c0_23 = arith.constant 0 : index
    %25 = vector.load %arg4[%c2, %c0_22, %c0_23] : memref<4x16x16xf32, #tpu.memory_space<vmem>>, vector<1x16x16xf32>
    %26 = vector.shape_cast %25 : vector<1x16x16xf32> to vector<16x16xf32>
    %c3 = arith.constant 3 : index
    %c0_24 = arith.constant 0 : index
    %c0_25 = arith.constant 0 : index
    %27 = vector.load %arg4[%c3, %c0_24, %c0_25] : memref<4x16x16xf32, #tpu.memory_space<vmem>>, vector<1x16x16xf32>
    %28 = vector.shape_cast %27 : vector<1x16x16xf32> to vector<16x16xf32>
    %c0_26 = arith.constant 0 : index
    %c0_27 = arith.constant 0 : index
    %c0_28 = arith.constant 0 : index
    %29 = vector.load %arg8[%c0_26, %c0_27, %c0_28] : memref<2x16x256xf32, #tpu.memory_space<vmem>>, vector<1x16x256xf32>
    %30 = vector.shape_cast %29 : vector<1x16x256xf32> to vector<16x256xf32>
    %c1_29 = arith.constant 1 : index
    %c0_30 = arith.constant 0 : index
    %c0_31 = arith.constant 0 : index
    %31 = vector.load %arg8[%c1_29, %c0_30, %c0_31] : memref<2x16x256xf32, #tpu.memory_space<vmem>>, vector<1x16x256xf32>
    %32 = vector.shape_cast %31 : vector<1x16x256xf32> to vector<16x256xf32>
    %cst_32 = arith.constant dense<0.000000e+00> : vector<16x256xf32>
    %33 = tpu.matmul %22, %30, %cst_32 {dimension_numbers = #tpu.dot_dimension_numbers<[1], [0], [0], [1], [0, 0, 1, 1], [], []>} : vector<16x16xf32>, vector<16x256xf32>, vector<16x256xf32> -> vector<16x256xf32>
    %cst_33 = arith.constant dense<0.000000e+00> : vector<16x256xf32>
    %34 = tpu.matmul %24, %32, %cst_33 {dimension_numbers = #tpu.dot_dimension_numbers<[1], [0], [0], [1], [0, 0, 1, 1], [], []>} : vector<16x16xf32>, vector<16x256xf32>, vector<16x256xf32> -> vector<16x256xf32>
    %35 = arith.addf %30, %32 : vector<16x256xf32>
    %cst_34 = arith.constant dense<0.000000e+00> : vector<16x256xf32>
    %36 = tpu.matmul %26, %35, %cst_34 {dimension_numbers = #tpu.dot_dimension_numbers<[1], [0], [0], [1], [0, 0, 1, 1], [], []>} : vector<16x16xf32>, vector<16x256xf32>, vector<16x256xf32> -> vector<16x256xf32>
    %37 = arith.subf %33, %34 : vector<16x256xf32>
    %38 = arith.subf %36, %33 : vector<16x256xf32>
    %39 = arith.subf %38, %34 : vector<16x256xf32>
    %c0_35 = arith.constant 0 : index
    %c0_36 = arith.constant 0 : index
    %40 = vector.load %arg3[%c0_35, %c0_36] : memref<16x256xf32, #tpu.memory_space<vmem>>, vector<16x256xf32>
    %c0_37 = arith.constant 0 : index
    %c0_38 = arith.constant 0 : index
    %c0_39 = arith.constant 0 : index
    %41 = vector.load %arg2[%c0_37, %c0_38, %c0_39] : memref<2x16x256xf32, #tpu.memory_space<vmem>>, vector<1x16x256xf32>
    %42 = vector.shape_cast %41 : vector<1x16x256xf32> to vector<16x256xf32>
    %43 = arith.mulf %40, %37 : vector<16x256xf32>
    %44 = arith.addf %42, %43 : vector<16x256xf32>
    %c1_40 = arith.constant 1 : index
    %c0_41 = arith.constant 0 : index
    %c0_42 = arith.constant 0 : index
    %45 = vector.load %arg2[%c1_40, %c0_41, %c0_42] : memref<2x16x256xf32, #tpu.memory_space<vmem>>, vector<1x16x256xf32>
    %46 = vector.shape_cast %45 : vector<1x16x256xf32> to vector<16x256xf32>
    %47 = arith.mulf %40, %39 : vector<16x256xf32>
    %48 = arith.addf %46, %47 : vector<16x256xf32>
    %cst_43 = arith.constant dense<0.000000e+00> : vector<16x256xf32>
    %49 = tpu.matmul %22, %44, %cst_43 {dimension_numbers = #tpu.dot_dimension_numbers<[1], [0], [0], [1], [0, 0, 1, 1], [], []>} : vector<16x16xf32>, vector<16x256xf32>, vector<16x256xf32> -> vector<16x256xf32>
    %cst_44 = arith.constant dense<0.000000e+00> : vector<16x256xf32>
    %50 = tpu.matmul %24, %48, %cst_44 {dimension_numbers = #tpu.dot_dimension_numbers<[1], [0], [0], [1], [0, 0, 1, 1], [], []>} : vector<16x16xf32>, vector<16x256xf32>, vector<16x256xf32> -> vector<16x256xf32>
    %51 = arith.addf %44, %48 : vector<16x256xf32>
    %cst_45 = arith.constant dense<0.000000e+00> : vector<16x256xf32>
    %52 = tpu.matmul %28, %51, %cst_45 {dimension_numbers = #tpu.dot_dimension_numbers<[1], [0], [0], [1], [0, 0, 1, 1], [], []>} : vector<16x16xf32>, vector<16x256xf32>, vector<16x256xf32> -> vector<16x256xf32>
    %53 = arith.addf %49, %50 : vector<16x256xf32>
    %54 = arith.subf %52, %49 : vector<16x256xf32>
    %55 = arith.addf %54, %50 : vector<16x256xf32>
    %c0_46 = arith.constant 0 : index
    %c0_47 = arith.constant 0 : index
    %c0_48 = arith.constant 0 : index
    %56 = vector.load %arg6[%c0_46, %c0_47, %c0_48] : memref<2x128x128xf32, #tpu.memory_space<vmem>>, vector<1x128x128xf32>
    %57 = vector.shape_cast %56 : vector<1x128x128xf32> to vector<128x128xf32>
    %c1_49 = arith.constant 1 : index
    %c0_50 = arith.constant 0 : index
    %c0_51 = arith.constant 0 : index
    %58 = vector.load %arg6[%c1_49, %c0_50, %c0_51] : memref<2x128x128xf32, #tpu.memory_space<vmem>>, vector<1x128x128xf32>
    %59 = vector.shape_cast %58 : vector<1x128x128xf32> to vector<128x128xf32>
    %60 = vector.extract_strided_slice %53 {offsets = [0, 0], sizes = [16, 128], strides = [1, 1]} : vector<16x256xf32> to vector<16x128xf32>
    %cst_52 = arith.constant dense<0.000000e+00> : vector<16x128xf32>
    %61 = tpu.matmul %60, %57, %cst_52 {dimension_numbers = #tpu.dot_dimension_numbers<[1], [0], [0], [1], [0, 0, 1, 1], [], []>} : vector<16x128xf32>, vector<128x128xf32>, vector<16x128xf32> -> vector<16x128xf32>
    %62 = vector.extract_strided_slice %55 {offsets = [0, 0], sizes = [16, 128], strides = [1, 1]} : vector<16x256xf32> to vector<16x128xf32>
    %cst_53 = arith.constant dense<0.000000e+00> : vector<16x128xf32>
    %63 = tpu.matmul %62, %59, %cst_53 {dimension_numbers = #tpu.dot_dimension_numbers<[1], [0], [0], [1], [0, 0, 1, 1], [], []>} : vector<16x128xf32>, vector<128x128xf32>, vector<16x128xf32> -> vector<16x128xf32>
    %64 = arith.addf %61, %63 : vector<16x128xf32>
    %c0_54 = arith.constant 0 : index
    %c0_55 = arith.constant 0 : index
    %65 = vector.load %arg7[%c0_54, %c0_55] : memref<16x256xf32, #tpu.memory_space<vmem>>, vector<16x128xf32>
    tpu.vector_store %arg7[%c0_54, %c0_55], %64 {strides = array<i32>} : memref<16x256xf32, #tpu.memory_space<vmem>>, vector<16x128xf32>,
    %66 = vector.extract_strided_slice %53 {offsets = [0, 128], sizes = [16, 128], strides = [1, 1]} : vector<16x256xf32> to vector<16x128xf32>
    %cst_56 = arith.constant dense<0.000000e+00> : vector<16x128xf32>
    %67 = tpu.matmul %66, %57, %cst_56 {dimension_numbers = #tpu.dot_dimension_numbers<[1], [0], [0], [1], [0, 0, 1, 1], [], []>} : vector<16x128xf32>, vector<128x128xf32>, vector<16x128xf32> -> vector<16x128xf32>
    %68 = vector.extract_strided_slice %55 {offsets = [0, 128], sizes = [16, 128], strides = [1, 1]} : vector<16x256xf32> to vector<16x128xf32>
    %cst_57 = arith.constant dense<0.000000e+00> : vector<16x128xf32>
    %69 = tpu.matmul %68, %59, %cst_57 {dimension_numbers = #tpu.dot_dimension_numbers<[1], [0], [0], [1], [0, 0, 1, 1], [], []>} : vector<16x128xf32>, vector<128x128xf32>, vector<16x128xf32> -> vector<16x128xf32>
    %70 = arith.addf %67, %69 : vector<16x128xf32>
    %c0_58 = arith.constant 0 : index
    %c128_59 = arith.constant 128 : index
    %71 = vector.load %arg7[%c0_58, %c128_59] : memref<16x256xf32, #tpu.memory_space<vmem>>, vector<16x128xf32>
    tpu.vector_store %arg7[%c0_58, %c128_59], %70 {strides = array<i32>} : memref<16x256xf32, #tpu.memory_space<vmem>>, vector<16x128xf32>,
    return
  }
  func.func @transform_0(%arg0: i32) -> (i32, i32) {
    %c0_i32 = arith.constant 0 : i32
    %c0_i32_0 = arith.constant 0 : i32
    return %c0_i32, %arg0 : i32, i32
  }
  func.func @transform_1(%arg0: i32) -> (i32, i32, i32) {
    %c0_i32 = arith.constant 0 : i32
    %c0_i32_0 = arith.constant 0 : i32
    %c0_i32_1 = arith.constant 0 : i32
    return %c0_i32, %c0_i32_0, %arg0 : i32, i32, i32
  }
  func.func @transform_2(%arg0: i32) -> (i32, i32) {
    %c0_i32 = arith.constant 0 : i32
    %c0_i32_0 = arith.constant 0 : i32
    %c0_i32_1 = arith.constant 0 : i32
    return %c0_i32, %c0_i32_0 : i32, i32
  }
  func.func @transform_3(%arg0: i32) -> (i32, i32, i32) {
    %c0_i32 = arith.constant 0 : i32
    %c0_i32_0 = arith.constant 0 : i32
    %c0_i32_1 = arith.constant 0 : i32
    %c0_i32_2 = arith.constant 0 : i32
    return %c0_i32, %c0_i32_0, %c0_i32_1 : i32, i32, i32
  }
  func.func @transform_4(%arg0: i32) -> (i32, i32) {
    %c0_i32 = arith.constant 0 : i32
    %c0_i32_0 = arith.constant 0 : i32
    %c0_i32_1 = arith.constant 0 : i32
    return %c0_i32, %c0_i32_0 : i32, i32
  }
  func.func @transform_5(%arg0: i32) -> (i32, i32, i32) {
    %c0_i32 = arith.constant 0 : i32
    %c0_i32_0 = arith.constant 0 : i32
    %c0_i32_1 = arith.constant 0 : i32
    %c0_i32_2 = arith.constant 0 : i32
    return %c0_i32, %c0_i32_0, %c0_i32_1 : i32, i32, i32
  }
  func.func @transform_6(%arg0: i32) -> (i32, i32) {
    %c0_i32 = arith.constant 0 : i32
    %c0_i32_0 = arith.constant 0 : i32
    return %c0_i32, %arg0 : i32, i32
  }
}

</mosaic_0001>

<llo_original>
// kernel: tpu_custom_call.1
$region0: #{tpu_custom_call.1}
  #allocation0 [shape = 'u32[]', space=smem, size = 0x4, offset = 0x4, fixed_abs, tag = 'smem constant byte address 0x4 - core index']
  #allocation1 [shape = 'u32[144,128]{1,0:T(1,128)}', space=vmem, size = 0x12000, scoped, tag = 'internal scratch']
  #allocation2 [shape = 'f32[2,16,256]{2,1,0:T(8,128)}', space=vmem, size = 0x8000, scoped, tag = 'scratch operand']
  %s0 = inlined_call_operand.hbm [shape: f32[16,256], index: 0, kind: input, shape index: {}, may-alias: {0,6}]
  %s1 = inlined_call_operand.vmem [shape: f32[2,16,256], index: 1, kind: input, shape index: {}]
  %s2 = inlined_call_operand.hbm [shape: f32[16,256], index: 2, kind: input, shape index: {}]
  %s3 = inlined_call_operand.hbm [shape: f32[4,16,16], index: 3, kind: input, shape index: {}]
  %s4 = inlined_call_operand.hbm [shape: f32[128,256], index: 4, kind: input, shape index: {}]
  %s5 = inlined_call_operand.hbm [shape: f32[2,128,128], index: 5, kind: input, shape index: {}]
  %s6 = inlined_call_operand.hbm [shape: f32[16,256], index: 6, kind: output, shape index: {}, may-alias: {0,6}]
  %s7 = sld [smem:[#allocation0]]
  $region54: #{tpu_custom_call.1} parent=0
    _
  %s9 = ssub.s32 1, %s7
  %s10 = scalar_select 0, %s9, %s7
  $region1: #{tpu_custom_call.1} parent=0
    #allocation3 [shape = 'u8[16384]{0}', space=vmem, size = 0x4000, scoped, tag = 'input window, operand 0, single buffered']
    #allocation4 [shape = 's32[1]{0}', space=sflag, size = 0x4, scoped, tag = 'scoped memory for tpu_custom_call.1']
    #allocation5 [shape = 's32[1]{0}', space=sflag, size = 0x4, scoped, tag = 'scoped memory for tpu_custom_call.1']
    #allocation6 [shape = 'u8[16384]{0}', space=vmem, size = 0x4000, scoped, tag = 'input window, operand 2, single buffered']
    #allocation7 [shape = 's32[1]{0}', space=sflag, size = 0x4, scoped, tag = 'scoped memory for tpu_custom_call.1']
    #allocation8 [shape = 'u8[32768]{0}', space=vmem, size = 0x8000, scoped, tag = 'input window, operand 3, single buffered']
    #allocation9 [shape = 'u8[131072]{0}', space=vmem, size = 0x20000, scoped, tag = 'input window, operand 4, single buffered']
    #allocation10 [shape = 's32[1]{0}', space=sflag, size = 0x4, scoped, tag = 'scoped memory for tpu_custom_call.1']
    #allocation11 [shape = 'u8[131072]{0}', space=vmem, size = 0x20000, scoped, tag = 'input window, operand 5, single buffered']
    #allocation12 [shape = 'u8[16384]{0}', space=vmem, size = 0x4000, scoped, tag = 'output window, operand 0, single buffered']
    %11 = vsyncpa [#allocation4], 0
    %12 = vsyncpa [#allocation7], 0
    %13 = vsyncpa [#allocation10], 0
    %14 = vsyncpa [#allocation5], 0
    // Predicated region
    $region2: #{tpu_custom_call.1} parent=1 // pred_check
      _
    $region3: #{tpu_custom_call.1} parent=1 // pred_check_branch
      %16 = sbr.rel (0) target = $region5
    $region4: #{tpu_custom_call.1} parent=1 // pred_region
      %s18 = ssub.s32 512, 512
      %19 = vsyncadd [#allocation4], %s18
      %s20 = sshll.u32 [#allocation3], 4
      %s21 = int_to_ptr.vmem [resolvable:$true] %s20
      %26 = dma.hbm_to_vmem [thread:$0]  %s0, 512, %s21, [#allocation4], 256, 256, 16
    $region5: #{tpu_custom_call.1} parent=1 // pred_fallthru
      _
    // Predicated region
    $region6: #{tpu_custom_call.1} parent=1 // pred_check
      _
    $region7: #{tpu_custom_call.1} parent=1 // pred_check_branch
      %28 = sbr.rel (0) target = $region9
    $region8: #{tpu_custom_call.1} parent=1 // pred_region
      _
    $region9: #{tpu_custom_call.1} parent=1 // pred_fallthru
      _
    // Predicated region
    $region10: #{tpu_custom_call.1} parent=1 // pred_check
      _
    $region11: #{tpu_custom_call.1} parent=1 // pred_check_branch
      %30 = sbr.rel (0) target = $region13
    $region12: #{tpu_custom_call.1} parent=1 // pred_region
      %s32 = ssub.s32 512, 512
      %33 = vsyncadd [#allocation7], %s32
      %s34 = sshll.u32 [#allocation6], 4
      %s35 = int_to_ptr.vmem [resolvable:$true] %s34
      %40 = dma.hbm_to_vmem [thread:$0]  %s2, 512, %s35, [#allocation7], 256, 256, 16
    $region13: #{tpu_custom_call.1} parent=1 // pred_fallthru
      _
    // Predicated region
    $region14: #{tpu_custom_call.1} parent=1 // pred_check
      _
    $region15: #{tpu_custom_call.1} parent=1 // pred_check_branch
      %42 = sbr.rel (0) target = $region17
    $region16: #{tpu_custom_call.1} parent=1 // pred_region
      %s44 = ssub.s32 1024, 1024
      %45 = vsyncadd [#allocation7], %s44
      %s46 = sshll.u32 [#allocation8], 4
      %s47 = int_to_ptr.vmem [resolvable:$true] %s46
      %52 = dma.hbm_to_vmem [thread:$0]  %s3, 1024, %s47, [#allocation7], 128, 128, 8
    $region17: #{tpu_custom_call.1} parent=1 // pred_fallthru
      _
    // Predicated region
    $region18: #{tpu_custom_call.1} parent=1 // pred_check
      _
    $region19: #{tpu_custom_call.1} parent=1 // pred_check_branch
      %54 = sbr.rel (0) target = $region21
    $region20: #{tpu_custom_call.1} parent=1 // pred_region
      %s56 = ssub.s32 4096, 4096
      %57 = vsyncadd [#allocation10], %s56
      %s58 = sshll.u32 [#allocation9], 4
      %s59 = int_to_ptr.vmem [resolvable:$true] %s58
      %64 = dma.hbm_to_vmem [thread:$0]  %s4, 4096, %s59, [#allocation10], 256, 256, 16
    $region21: #{tpu_custom_call.1} parent=1 // pred_fallthru
      _
    // Predicated region
    $region22: #{tpu_custom_call.1} parent=1 // pred_check
      _
    $region23: #{tpu_custom_call.1} parent=1 // pred_check_branch
      %66 = sbr.rel (0) target = $region25
    $region24: #{tpu_custom_call.1} parent=1 // pred_region
      %s68 = ssub.s32 4096, 4096
      %69 = vsyncadd [#allocation10], %s68
      %s70 = sshll.u32 [#allocation11], 4
      %s71 = int_to_ptr.vmem [resolvable:$true] %s70
      %76 = dma.hbm_to_vmem [thread:$0]  %s5, 4096, %s71, [#allocation10], 128, 128, 8
    $region25: #{tpu_custom_call.1} parent=1 // pred_fallthru
      _
    // Predicated region
    $region26: #{tpu_custom_call.1} parent=1 // pred_check
      _
    $region27: #{tpu_custom_call.1} parent=1 // pred_check_branch
      %78 = sbr.rel (0) target = $region29
    $region28: #{tpu_custom_call.1} parent=1 // pred_region
      %79 = dma.done [#allocation4], 512
    $region29: #{tpu_custom_call.1} parent=1 // pred_fallthru
      _
    // Predicated region
    $region30: #{tpu_custom_call.1} parent=1 // pred_check
      _
    $region31: #{tpu_custom_call.1} parent=1 // pred_check_branch
      %81 = sbr.rel (0) target = $region33
    $region32: #{tpu_custom_call.1} parent=1 // pred_region
      %82 = dma.done [#allocation7], 512
    $region33: #{tpu_custom_call.1} parent=1 // pred_fallthru
      _
    // Predicated region
    $region34: #{tpu_custom_call.1} parent=1 // pred_check
      _
    $region35: #{tpu_custom_call.1} parent=1 // pred_check_branch
      %84 = sbr.rel (0) target = $region37
    $region36: #{tpu_custom_call.1} parent=1 // pred_region
      %85 = dma.done [#allocation7], 1024
    $region37: #{tpu_custom_call.1} parent=1 // pred_fallthru
      _
    // Predicated region
    $region38: #{tpu_custom_call.1} parent=1 // pred_check
      _
    $region39: #{tpu_custom_call.1} parent=1 // pred_check_branch
      %87 = sbr.rel (0) target = $region41
    $region40: #{tpu_custom_call.1} parent=1 // pred_region
      %88 = dma.done [#allocation10], 4096
    $region41: #{tpu_custom_call.1} parent=1 // pred_fallthru
      _
    // Predicated region
    $region42: #{tpu_custom_call.1} parent=1 // pred_check
      _
    $region43: #{tpu_custom_call.1} parent=1 // pred_check_branch
      %90 = sbr.rel (0) target = $region45
    $region44: #{tpu_custom_call.1} parent=1 // pred_region
      %91 = dma.done [#allocation10], 4096
    $region45: #{tpu_custom_call.1} parent=1 // pred_fallthru
      _
    %v92 = vld [vmem:[#allocation9] sm:$0xff]
    %v93 = vld [vmem:[#allocation9 + $0x8] sm:$0xff]
    %v94 = vld [vmem:[#allocation9 + $0x10] sm:$0xff]
    %v95 = vld [vmem:[#allocation9 + $0x18] sm:$0xff]
    %v96 = vld [vmem:[#allocation9 + $0x20] sm:$0xff]
    %v97 = vld [vmem:[#allocation9 + $0x28] sm:$0xff]
    %v98 = vld [vmem:[#allocation9 + $0x30] sm:$0xff]
    %v99 = vld [vmem:[#allocation9 + $0x38] sm:$0xff]
    %v100 = vld [vmem:[#allocation9 + $0x40] sm:$0xff]
    %v101 = vld [vmem:[#allocation9 + $0x48] sm:$0xff]
    %v102 = vld [vmem:[#allocation9 + $0x50] sm:$0xff]
    %v103 = vld [vmem:[#allocation9 + $0x58] sm:$0xff]
    %v104 = vld [vmem:[#allocation9 + $0x60] sm:$0xff]
    %v105 = vld [vmem:[#allocation9 + $0x68] sm:$0xff]
    %v106 = vld [vmem:[#allocation9 + $0x70] sm:$0xff]
    %v107 = vld [vmem:[#allocation9 + $0x78] sm:$0xff]
    %v108 = vld [vmem:[#allocation9 + $0x80] sm:$0xff]
    %v109 = vld [vmem:[#allocation9 + $0x88] sm:$0xff]
    %v110 = vld [vmem:[#allocation9 + $0x90] sm:$0xff]
    %v111 = vld [vmem:[#allocation9 + $0x98] sm:$0xff]
    %v112 = vld [vmem:[#allocation9 + $0xa0] sm:$0xff]
    %v113 = vld [vmem:[#allocation9 + $0xa8] sm:$0xff]
    %v114 = vld [vmem:[#allocation9 + $0xb0] sm:$0xff]
    %v115 = vld [vmem:[#allocation9 + $0xb8] sm:$0xff]
    %v116 = vld [vmem:[#allocation9 + $0xc0] sm:$0xff]
    %v117 = vld [vmem:[#allocation9 + $0xc8] sm:$0xff]
    %v118 = vld [vmem:[#allocation9 + $0xd0] sm:$0xff]
    %v119 = vld [vmem:[#allocation9 + $0xd8] sm:$0xff]
    %v120 = vld [vmem:[#allocation9 + $0xe0] sm:$0xff]
    %v121 = vld [vmem:[#allocation9 + $0xe8] sm:$0xff]
    %v122 = vld [vmem:[#allocation9 + $0xf0] sm:$0xff]
    %v123 = vld [vmem:[#allocation9 + $0xf8] sm:$0xff]
    %v124 = vld [vmem:[#allocation3] sm:$0xff]
    %v125 = vld [vmem:[#allocation3 + $0x10] sm:$0xff]
    %126 = vmatprep.subr.mxu0 %v123
    %127 = vmatpush1.msra.mxu0 %v122
    %128 = vmatprep.subr.mxu0 %v121
    %129 = vmatpush1.msra.mxu0 %v120
    %130 = vmatprep.subr.mxu0 %v119
    %131 = vmatpush1.msra.mxu0 %v118
    %132 = vmatprep.subr.mxu0 %v117
    %133 = vmatpush1.msra.mxu0 %v116
    %134 = vmatprep.subr.mxu0 %v115
    %135 = vmatpush1.msra.mxu0 %v114
    %136 = vmatprep.subr.mxu0 %v113
    %137 = vmatpush1.msra.mxu0 %v112
    %138 = vmatprep.subr.mxu0 %v111
    %139 = vmatpush1.msra.mxu0 %v110
    %140 = vmatprep.subr.mxu0 %v109
    %141 = vmatpush1.msra.mxu0 %v108
    %142 = vmatprep.subr.mxu0 %v107
    %143 = vmatpush1.msra.mxu0 %v106
    %144 = vmatprep.subr.mxu0 %v105
    %145 = vmatpush1.msra.mxu0 %v104
    %146 = vmatprep.subr.mxu0 %v103
    %147 = vmatpush1.msra.mxu0 %v102
    %148 = vmatprep.subr.mxu0 %v101
    %149 = vmatpush1.msra.mxu0 %v100
    %150 = vmatprep.subr.mxu0 %v99
    %151 = vmatpush1.msra.mxu0 %v98
    %152 = vmatprep.subr.mxu0 %v97
    %153 = vmatpush1.msra.mxu0 %v96
    %154 = vmatprep.subr.mxu0 %v95
    %155 = vmatpush1.msra.mxu0 %v94
    %156 = vmatprep.subr.mxu0 %v93
    %157 = vmatpush1.msra.mxu0 %v92
    %158 = vmatprep.subr.mxu0 0.0
    %159 = vmatpush2.msra.mxu0 0.0
    %160 = vmatprep.subr.mxu0 0.0
    %161 = vmatpush2.msra.mxu0 0.0
    %162 = vmatprep.subr.mxu0 0.0
    %163 = vmatpush2.msra.mxu0 0.0
    %164 = vmatprep.subr.mxu0 0.0
    %165 = vmatpush2.msra.mxu0 0.0
    %166 = vmatprep.subr.mxu0 0.0
    %167 = vmatpush2.msra.mxu0 0.0
    %168 = vmatprep.subr.mxu0 0.0
    %169 = vmatpush2.msra.mxu0 0.0
    %170 = vmatprep.subr.mxu0 0.0
    %171 = vmatpush2.msra.mxu0 0.0
    %172 = vmatprep.subr.mxu0 0.0
    %173 = vmatpush2.msra.mxu0 0.0
    %174 = vmatprep.subr.mxu0 0.0
    %175 = vmatpush2.msra.mxu0 0.0
    %176 = vmatprep.subr.mxu0 0.0
    %177 = vmatpush2.msra.mxu0 0.0
    %178 = vmatprep.subr.mxu0 0.0
    %179 = vmatpush2.msra.mxu0 0.0
    %180 = vmatprep.subr.mxu0 0.0
    %181 = vmatpush2.msra.mxu0 0.0
    %182 = vmatprep.subr.mxu0 0.0
    %183 = vmatpush2.msra.mxu0 0.0
    %184 = vmatprep.subr.mxu0 0.0
    %185 = vmatpush2.msra.mxu0 0.0
    %186 = vmatprep.subr.mxu0 0.0
    %187 = vmatpush2.msra.mxu0 0.0
    %188 = vmatprep.subr.mxu0 0.0
    %189 = vmatpush2.msra.mxu0 0.0
    %190 = vmatprep.mubr.f32.mxu0 0.0
    %191 = vmatmul.mubr.f32.gmra.mxu0 %v124
    %v192 = vpop.f32.mrf.mxu0
    %v193 = vadd.f32 0.0, %v192
    %v194 = vpop.f32.mrf.mxu0
    %v195 = vadd.f32 0.0, %v194
    %196 = vmatprep.mubr.f32.mxu0 0.0
    %197 = vmatmul.mubr.f32.gmra.mxu0 %v125
    %v198 = vpop.f32.mrf.mxu0
    %v199 = vadd.f32 0.0, %v198
    %v200 = vpop.f32.mrf.mxu0
    %v201 = vadd.f32 0.0, %v200
    %202 = vdwg.mxu0
    %203 = vst [vmem:[#allocation2] sm:$0xff] %v193
    %204 = vst [vmem:[#allocation2 + $0x10] sm:$0xff] %v199
    %s205 = scalar_lea.vmem [#allocation2], 32
    %206 = vst [vmem:[%s205] sm:$0xff] %v195
    %207 = vst [vmem:[%s205 + $0x10] sm:$0xff] %v201
    %v208 = vld [vmem:[#allocation3 + $0x8] sm:$0xff]
    %v209 = vld [vmem:[#allocation3 + $0x18] sm:$0xff]
    %210 = vmatprep.subr.mxu0 %v123
    %211 = vmatpush1.msra.mxu0 %v122
    %212 = vmatprep.subr.mxu0 %v121
    %213 = vmatpush1.msra.mxu0 %v120
    %214 = vmatprep.subr.mxu0 %v119
    %215 = vmatpush1.msra.mxu0 %v118
    %216 = vmatprep.subr.mxu0 %v117
    %217 = vmatpush1.msra.mxu0 %v116
    %218 = vmatprep.subr.mxu0 %v115
    %219 = vmatpush1.msra.mxu0 %v114
    %220 = vmatprep.subr.mxu0 %v113
    %221 = vmatpush1.msra.mxu0 %v112
    %222 = vmatprep.subr.mxu0 %v111
    %223 = vmatpush1.msra.mxu0 %v110
    %224 = vmatprep.subr.mxu0 %v109
    %225 = vmatpush1.msra.mxu0 %v108
    %226 = vmatprep.subr.mxu0 %v107
    %227 = vmatpush1.msra.mxu0 %v106
    %228 = vmatprep.subr.mxu0 %v105
    %229 = vmatpush1.msra.mxu0 %v104
    %230 = vmatprep.subr.mxu0 %v103
    %231 = vmatpush1.msra.mxu0 %v102
    %232 = vmatprep.subr.mxu0 %v101
    %233 = vmatpush1.msra.mxu0 %v100
    %234 = vmatprep.subr.mxu0 %v99
    %235 = vmatpush1.msra.mxu0 %v98
    %236 = vmatprep.subr.mxu0 %v97
    %237 = vmatpush1.msra.mxu0 %v96
    %238 = vmatprep.subr.mxu0 %v95
    %239 = vmatpush1.msra.mxu0 %v94
    %240 = vmatprep.subr.mxu0 %v93
    %241 = vmatpush1.msra.mxu0 %v92
    %242 = vmatprep.subr.mxu0 0.0
    %243 = vmatpush2.msra.mxu0 0.0
    %244 = vmatprep.subr.mxu0 0.0
    %245 = vmatpush2.msra.mxu0 0.0
    %246 = vmatprep.subr.mxu0 0.0
    %247 = vmatpush2.msra.mxu0 0.0
    %248 = vmatprep.subr.mxu0 0.0
    %249 = vmatpush2.msra.mxu0 0.0
    %250 = vmatprep.subr.mxu0 0.0
    %251 = vmatpush2.msra.mxu0 0.0
    %252 = vmatprep.subr.mxu0 0.0
    %253 = vmatpush2.msra.mxu0 0.0
    %254 = vmatprep.subr.mxu0 0.0
    %255 = vmatpush2.msra.mxu0 0.0
    %256 = vmatprep.subr.mxu0 0.0
    %257 = vmatpush2.msra.mxu0 0.0
    %258 = vmatprep.subr.mxu0 0.0
    %259 = vmatpush2.msra.mxu0 0.0
    %260 = vmatprep.subr.mxu0 0.0
    %261 = vmatpush2.msra.mxu0 0.0
    %262 = vmatprep.subr.mxu0 0.0
    %263 = vmatpush2.msra.mxu0 0.0
    %264 = vmatprep.subr.mxu0 0.0
    %265 = vmatpush2.msra.mxu0 0.0
    %266 = vmatprep.subr.mxu0 0.0
    %267 = vmatpush2.msra.mxu0 0.0
    %268 = vmatprep.subr.mxu0 0.0
    %269 = vmatpush2.msra.mxu0 0.0
    %270 = vmatprep.subr.mxu0 0.0
    %271 = vmatpush2.msra.mxu0 0.0
    %272 = vmatprep.subr.mxu0 0.0
    %273 = vmatpush2.msra.mxu0 0.0
    %274 = vmatprep.mubr.f32.mxu0 0.0
    %275 = vmatmul.mubr.f32.gmra.mxu0 %v208
    %v276 = vpop.f32.mrf.mxu0
    %v277 = vadd.f32 0.0, %v276
    %v278 = vpop.f32.mrf.mxu0
    %v279 = vadd.f32 0.0, %v278
    %280 = vmatprep.mubr.f32.mxu0 0.0
    %281 = vmatmul.mubr.f32.gmra.mxu0 %v209
    %v282 = vpop.f32.mrf.mxu0
    %v283 = vadd.f32 0.0, %v282
    %v284 = vpop.f32.mrf.mxu0
    %v285 = vadd.f32 0.0, %v284
    %286 = vdwg.mxu0
    %287 = vst [vmem:[#allocation2 + $0x8] sm:$0xff] %v277
    %288 = vst [vmem:[#allocation2 + $0x18] sm:$0xff] %v283
    %289 = vst [vmem:[%s205 + $0x8] sm:$0xff] %v279
    %290 = vst [vmem:[%s205 + $0x18] sm:$0xff] %v285
    %v291 = vld [vmem:[#allocation8] sm:$0xff]
    %v292 = vld [vmem:[#allocation8 + $0x8] sm:$0xff]
    %s293 = scalar_lea.vmem [#allocation8], 16
    %v294 = vld [vmem:[%s293] sm:$0xff]
    %v295 = vld [vmem:[%s293 + $0x8] sm:$0xff]
    %s296 = scalar_lea.vmem [#allocation8], 32
    %v297 = vld [vmem:[%s296] sm:$0xff]
    %v298 = vld [vmem:[%s296 + $0x8] sm:$0xff]
    %s299 = scalar_lea.vmem [#allocation8], 48
    %v300 = vld [vmem:[%s299] sm:$0xff]
    %v301 = vld [vmem:[%s299 + $0x8] sm:$0xff]
    %v302 = vld [vmem:[#allocation2] sm:$0xff]
    %v303 = vld [vmem:[#allocation2 + $0x8] sm:$0xff]
    %v304 = vld [vmem:[#allocation2 + $0x10] sm:$0xff]
    %v305 = vld [vmem:[#allocation2 + $0x18] sm:$0xff]
    %v306 = vld [vmem:[%s205] sm:$0xff]
    %v307 = vld [vmem:[%s205 + $0x8] sm:$0xff]
    %v308 = vld [vmem:[%s205 + $0x10] sm:$0xff]
    %v309 = vld [vmem:[%s205 + $0x18] sm:$0xff]
    %vm310 = vcmask 130048
    %v312 = vsel %vm310, %v291, 0
    %v315 = vsel %vm310, %v292, 0
    %317 = vmatprep.subr.mxu0 0.0
    %318 = vmatpush1.msra.mxu0 0.0
    %319 = vmatprep.subr.mxu0 0.0
    %320 = vmatpush1.msra.mxu0 0.0
    %321 = vmatprep.subr.mxu0 0.0
    %322 = vmatpush1.msra.mxu0 0.0
    %323 = vmatprep.subr.mxu0 0.0
    %324 = vmatpush1.msra.mxu0 0.0
    %325 = vmatprep.subr.mxu0 0.0
    %326 = vmatpush1.msra.mxu0 0.0
    %327 = vmatprep.subr.mxu0 0.0
    %328 = vmatpush1.msra.mxu0 0.0
    %329 = vmatprep.subr.mxu0 0.0
    %330 = vmatpush1.msra.mxu0 0.0
    %331 = vmatprep.subr.mxu0 0.0
    %332 = vmatpush1.msra.mxu0 0.0
    %333 = vmatprep.subr.mxu0 0.0
    %334 = vmatpush1.msra.mxu0 0.0
    %335 = vmatprep.subr.mxu0 0.0
    %336 = vmatpush1.msra.mxu0 0.0
    %337 = vmatprep.subr.mxu0 0.0
    %338 = vmatpush1.msra.mxu0 0.0
    %339 = vmatprep.subr.mxu0 0.0
    %340 = vmatpush1.msra.mxu0 0.0
    %341 = vmatprep.subr.mxu0 0.0
    %342 = vmatpush1.msra.mxu0 0.0
    %343 = vmatprep.subr.mxu0 0.0
    %344 = vmatpush1.msra.mxu0 0.0
    %345 = vmatprep.subr.mxu0 %v305
    %346 = vmatpush1.msra.mxu0 %v304
    %347 = vmatprep.subr.mxu0 %v303
    %348 = vmatpush1.msra.mxu0 %v302
    %349 = vmatprep.subr.mxu0 0.0
    %350 = vmatpush2.msra.mxu0 0.0
    %351 = vmatprep.subr.mxu0 0.0
    %352 = vmatpush2.msra.mxu0 0.0
    %353 = vmatprep.subr.mxu0 0.0
    %354 = vmatpush2.msra.mxu0 0.0
    %355 = vmatprep.subr.mxu0 0.0
    %356 = vmatpush2.msra.mxu0 0.0
    %357 = vmatprep.subr.mxu0 0.0
    %358 = vmatpush2.msra.mxu0 0.0
    %359 = vmatprep.subr.mxu0 0.0
    %360 = vmatpush2.msra.mxu0 0.0
    %361 = vmatprep.subr.mxu0 0.0
    %362 = vmatpush2.msra.mxu0 0.0
    %363 = vmatprep.subr.mxu0 0.0
    %364 = vmatpush2.msra.mxu0 0.0
    %365 = vmatprep.subr.mxu0 0.0
    %366 = vmatpush2.msra.mxu0 0.0
    %367 = vmatprep.subr.mxu0 0.0
    %368 = vmatpush2.msra.mxu0 0.0
    %369 = vmatprep.subr.mxu0 0.0
    %370 = vmatpush2.msra.mxu0 0.0
    %371 = vmatprep.subr.mxu0 0.0
    %372 = vmatpush2.msra.mxu0 0.0
    %373 = vmatprep.subr.mxu0 0.0
    %374 = vmatpush2.msra.mxu0 0.0
    %375 = vmatprep.subr.mxu0 0.0
    %376 = vmatpush2.msra.mxu0 0.0
    %377 = vmatprep.subr.mxu0 0.0
    %378 = vmatpush2.msra.mxu0 0.0
    %379 = vmatprep.subr.mxu0 0.0
    %380 = vmatpush2.msra.mxu0 0.0
    %381 = vmatprep.mubr.f32.mxu0 0.0
    %382 = vmatmul.mubr.f32.gmra.mxu0 %v312
    %v383 = vpop.f32.mrf.mxu0
    %v384 = vadd.f32 0.0, %v383
    %v385 = vpop.f32.mrf.mxu0
    %v386 = vadd.f32 0.0, %v385
    %387 = vmatprep.mubr.f32.mxu0 0.0
    %388 = vmatmul.mubr.f32.gmra.mxu0 %v315
    %v389 = vpop.f32.mrf.mxu0
    %v390 = vadd.f32 0.0, %v389
    %v391 = vpop.f32.mrf.mxu0
    %v392 = vadd.f32 0.0, %v391
    %393 = vdwg.mxu0
    %v395 = vsel %vm310, %v294, 0
    %v398 = vsel %vm310, %v295, 0
    %400 = vmatprep.subr.mxu0 0.0
    %401 = vmatpush1.msra.mxu0 0.0
    %402 = vmatprep.subr.mxu0 0.0
    %403 = vmatpush1.msra.mxu0 0.0
    %404 = vmatprep.subr.mxu0 0.0
    %405 = vmatpush1.msra.mxu0 0.0
    %406 = vmatprep.subr.mxu0 0.0
    %407 = vmatpush1.msra.mxu0 0.0
    %408 = vmatprep.subr.mxu0 0.0
    %409 = vmatpush1.msra.mxu0 0.0
    %410 = vmatprep.subr.mxu0 0.0
    %411 = vmatpush1.msra.mxu0 0.0
    %412 = vmatprep.subr.mxu0 0.0
    %413 = vmatpush1.msra.mxu0 0.0
    %414 = vmatprep.subr.mxu0 0.0
    %415 = vmatpush1.msra.mxu0 0.0
    %416 = vmatprep.subr.mxu0 0.0
    %417 = vmatpush1.msra.mxu0 0.0
    %418 = vmatprep.subr.mxu0 0.0
    %419 = vmatpush1.msra.mxu0 0.0
    %420 = vmatprep.subr.mxu0 0.0
    %421 = vmatpush1.msra.mxu0 0.0
    %422 = vmatprep.subr.mxu0 0.0
    %423 = vmatpush1.msra.mxu0 0.0
    %424 = vmatprep.subr.mxu0 0.0
    %425 = vmatpush1.msra.mxu0 0.0
    %426 = vmatprep.subr.mxu0 0.0
    %427 = vmatpush1.msra.mxu0 0.0
    %428 = vmatprep.subr.mxu0 %v309
    %429 = vmatpush1.msra.mxu0 %v308
    %430 = vmatprep.subr.mxu0 %v307
    %431 = vmatpush1.msra.mxu0 %v306
    %432 = vmatprep.subr.mxu0 0.0
    %433 = vmatpush2.msra.mxu0 0.0
    %434 = vmatprep.subr.mxu0 0.0
    %435 = vmatpush2.msra.mxu0 0.0
    %436 = vmatprep.subr.mxu0 0.0
    %437 = vmatpush2.msra.mxu0 0.0
    %438 = vmatprep.subr.mxu0 0.0
    %439 = vmatpush2.msra.mxu0 0.0
    %440 = vmatprep.subr.mxu0 0.0
    %441 = vmatpush2.msra.mxu0 0.0
    %442 = vmatprep.subr.mxu0 0.0
    %443 = vmatpush2.msra.mxu0 0.0
    %444 = vmatprep.subr.mxu0 0.0
    %445 = vmatpush2.msra.mxu0 0.0
    %446 = vmatprep.subr.mxu0 0.0
    %447 = vmatpush2.msra.mxu0 0.0
    %448 = vmatprep.subr.mxu0 0.0
    %449 = vmatpush2.msra.mxu0 0.0
    %450 = vmatprep.subr.mxu0 0.0
    %451 = vmatpush2.msra.mxu0 0.0
    %452 = vmatprep.subr.mxu0 0.0
    %453 = vmatpush2.msra.mxu0 0.0
    %454 = vmatprep.subr.mxu0 0.0
    %455 = vmatpush2.msra.mxu0 0.0
    %456 = vmatprep.subr.mxu0 0.0
    %457 = vmatpush2.msra.mxu0 0.0
    %458 = vmatprep.subr.mxu0 0.0
    %459 = vmatpush2.msra.mxu0 0.0
    %460 = vmatprep.subr.mxu0 0.0
    %461 = vmatpush2.msra.mxu0 0.0
    %462 = vmatprep.subr.mxu0 0.0
    %463 = vmatpush2.msra.mxu0 0.0
    %464 = vmatprep.mubr.f32.mxu0 0.0
    %465 = vmatmul.mubr.f32.gmra.mxu0 %v395
    %v466 = vpop.f32.mrf.mxu0
    %v467 = vadd.f32 0.0, %v466
    %v468 = vpop.f32.mrf.mxu0
    %v469 = vadd.f32 0.0, %v468
    %470 = vmatprep.mubr.f32.mxu0 0.0
    %471 = vmatmul.mubr.f32.gmra.mxu0 %v398
    %v472 = vpop.f32.mrf.mxu0
    %v473 = vadd.f32 0.0, %v472
    %v474 = vpop.f32.mrf.mxu0
    %v475 = vadd.f32 0.0, %v474
    %476 = vdwg.mxu0
    %v477 = vadd.f32 %v302, %v306
    %v478 = vadd.f32 %v303, %v307
    %v479 = vadd.f32 %v304, %v308
    %v480 = vadd.f32 %v305, %v309
    %v482 = vsel %vm310, %v297, 0
    %v485 = vsel %vm310, %v298, 0
    %487 = vmatprep.subr.mxu0 0.0
    %488 = vmatpush1.msra.mxu0 0.0
    %489 = vmatprep.subr.mxu0 0.0
    %490 = vmatpush1.msra.mxu0 0.0
    %491 = vmatprep.subr.mxu0 0.0
    %492 = vmatpush1.msra.mxu0 0.0
    %493 = vmatprep.subr.mxu0 0.0
    %494 = vmatpush1.msra.mxu0 0.0
    %495 = vmatprep.subr.mxu0 0.0
    %496 = vmatpush1.msra.mxu0 0.0
    %497 = vmatprep.subr.mxu0 0.0
    %498 = vmatpush1.msra.mxu0 0.0
    %499 = vmatprep.subr.mxu0 0.0
    %500 = vmatpush1.msra.mxu0 0.0
    %501 = vmatprep.subr.mxu0 0.0
    %502 = vmatpush1.msra.mxu0 0.0
    %503 = vmatprep.subr.mxu0 0.0
    %504 = vmatpush1.msra.mxu0 0.0
    %505 = vmatprep.subr.mxu0 0.0
    %506 = vmatpush1.msra.mxu0 0.0
    %507 = vmatprep.subr.mxu0 0.0
    %508 = vmatpush1.msra.mxu0 0.0
    %509 = vmatprep.subr.mxu0 0.0
    %510 = vmatpush1.msra.mxu0 0.0
    %511 = vmatprep.subr.mxu0 0.0
    %512 = vmatpush1.msra.mxu0 0.0
    %513 = vmatprep.subr.mxu0 0.0
    %514 = vmatpush1.msra.mxu0 0.0
    %515 = vmatprep.subr.mxu0 %v480
    %516 = vmatpush1.msra.mxu0 %v479
    %517 = vmatprep.subr.mxu0 %v478
    %518 = vmatpush1.msra.mxu0 %v477
    %519 = vmatprep.subr.mxu0 0.0
    %520 = vmatpush2.msra.mxu0 0.0
    %521 = vmatprep.subr.mxu0 0.0
    %522 = vmatpush2.msra.mxu0 0.0
    %523 = vmatprep.subr.mxu0 0.0
    %524 = vmatpush2.msra.mxu0 0.0
    %525 = vmatprep.subr.mxu0 0.0
    %526 = vmatpush2.msra.mxu0 0.0
    %527 = vmatprep.subr.mxu0 0.0
    %528 = vmatpush2.msra.mxu0 0.0
    %529 = vmatprep.subr.mxu0 0.0
    %530 = vmatpush2.msra.mxu0 0.0
    %531 = vmatprep.subr.mxu0 0.0
    %532 = vmatpush2.msra.mxu0 0.0
    %533 = vmatprep.subr.mxu0 0.0
    %534 = vmatpush2.msra.mxu0 0.0
    %535 = vmatprep.subr.mxu0 0.0
    %536 = vmatpush2.msra.mxu0 0.0
    %537 = vmatprep.subr.mxu0 0.0
    %538 = vmatpush2.msra.mxu0 0.0
    %539 = vmatprep.subr.mxu0 0.0
    %540 = vmatpush2.msra.mxu0 0.0
    %541 = vmatprep.subr.mxu0 0.0
    %542 = vmatpush2.msra.mxu0 0.0
    %543 = vmatprep.subr.mxu0 0.0
    %544 = vmatpush2.msra.mxu0 0.0
    %545 = vmatprep.subr.mxu0 0.0
    %546 = vmatpush2.msra.mxu0 0.0
    %547 = vmatprep.subr.mxu0 0.0
    %548 = vmatpush2.msra.mxu0 0.0
    %549 = vmatprep.subr.mxu0 0.0
    %550 = vmatpush2.msra.mxu0 0.0
    %551 = vmatprep.mubr.f32.mxu0 0.0
    %552 = vmatmul.mubr.f32.gmra.mxu0 %v482
    %v553 = vpop.f32.mrf.mxu0
    %v554 = vadd.f32 0.0, %v553
    %v555 = vpop.f32.mrf.mxu0
    %v556 = vadd.f32 0.0, %v555
    %557 = vmatprep.mubr.f32.mxu0 0.0
    %558 = vmatmul.mubr.f32.gmra.mxu0 %v485
    %v559 = vpop.f32.mrf.mxu0
    %v560 = vadd.f32 0.0, %v559
    %v561 = vpop.f32.mrf.mxu0
    %v562 = vadd.f32 0.0, %v561
    %563 = vdwg.mxu0
    %v564 = vsub.f32 %v384, %v467
    %v565 = vsub.f32 %v386, %v469
    %v566 = vsub.f32 %v390, %v473
    %v567 = vsub.f32 %v392, %v475
    %v568 = vsub.f32 %v554, %v384
    %v569 = vsub.f32 %v556, %v386
    %v570 = vsub.f32 %v560, %v390
    %v571 = vsub.f32 %v562, %v392
    %v572 = vsub.f32 %v568, %v467
    %v573 = vsub.f32 %v569, %v469
    %v574 = vsub.f32 %v570, %v473
    %v575 = vsub.f32 %v571, %v475
    %v576 = vld [vmem:[#allocation6] sm:$0xff]
    %v577 = vld [vmem:[#allocation6 + $0x8] sm:$0xff]
    %v578 = vld [vmem:[#allocation6 + $0x10] sm:$0xff]
    %v579 = vld [vmem:[#allocation6 + $0x18] sm:$0xff]
    %v580 = vld [vmem:[%s1] sm:$0xff]
    %v581 = vld [vmem:[%s1 + $0x8] sm:$0xff]
    %v582 = vld [vmem:[%s1 + $0x10] sm:$0xff]
    %v583 = vld [vmem:[%s1 + $0x18] sm:$0xff]
    %v584 = vmul.f32 %v576, %v564
    %v585 = vmul.f32 %v577, %v565
    %v586 = vmul.f32 %v578, %v566
    %v587 = vmul.f32 %v579, %v567
    %v588 = vadd.f32 %v580, %v584
    %v589 = vadd.f32 %v581, %v585
    %v590 = vadd.f32 %v582, %v586
    %v591 = vadd.f32 %v583, %v587
    %s592 = scalar_lea.vmem %s1, 32
    %v593 = vld [vmem:[%s592] sm:$0xff]
    %v594 = vld [vmem:[%s592 + $0x8] sm:$0xff]
    %v595 = vld [vmem:[%s592 + $0x10] sm:$0xff]
    %v596 = vld [vmem:[%s592 + $0x18] sm:$0xff]
    %v597 = vmul.f32 %v576, %v572
    %v598 = vmul.f32 %v577, %v573
    %v599 = vmul.f32 %v578, %v574
    %v600 = vmul.f32 %v579, %v575
    %v601 = vadd.f32 %v593, %v597
    %v602 = vadd.f32 %v594, %v598
    %v603 = vadd.f32 %v595, %v599
    %v604 = vadd.f32 %v596, %v600
    %605 = vmatprep.subr.mxu0 0.0
    %606 = vmatpush1.msra.mxu0 0.0
    %607 = vmatprep.subr.mxu0 0.0
    %608 = vmatpush1.msra.mxu0 0.0
    %609 = vmatprep.subr.mxu0 0.0
    %610 = vmatpush1.msra.mxu0 0.0
    %611 = vmatprep.subr.mxu0 0.0
    %612 = vmatpush1.msra.mxu0 0.0
    %613 = vmatprep.subr.mxu0 0.0
    %614 = vmatpush1.msra.mxu0 0.0
    %615 = vmatprep.subr.mxu0 0.0
    %616 = vmatpush1.msra.mxu0 0.0
    %617 = vmatprep.subr.mxu0 0.0
    %618 = vmatpush1.msra.mxu0 0.0
    %619 = vmatprep.subr.mxu0 0.0
    %620 = vmatpush1.msra.mxu0 0.0
    %621 = vmatprep.subr.mxu0 0.0
    %622 = vmatpush1.msra.mxu0 0.0
    %623 = vmatprep.subr.mxu0 0.0
    %624 = vmatpush1.msra.mxu0 0.0
    %625 = vmatprep.subr.mxu0 0.0
    %626 = vmatpush1.msra.mxu0 0.0
    %627 = vmatprep.subr.mxu0 0.0
    %628 = vmatpush1.msra.mxu0 0.0
    %629 = vmatprep.subr.mxu0 0.0
    %630 = vmatpush1.msra.mxu0 0.0
    %631 = vmatprep.subr.mxu0 0.0
    %632 = vmatpush1.msra.mxu0 0.0
    %633 = vmatprep.subr.mxu0 %v591
    %634 = vmatpush1.msra.mxu0 %v590
    %635 = vmatprep.subr.mxu0 %v589
    %636 = vmatpush1.msra.mxu0 %v588
    %637 = vmatprep.subr.mxu0 0.0
    %638 = vmatpush2.msra.mxu0 0.0
    %639 = vmatprep.subr.mxu0 0.0
    %640 = vmatpush2.msra.mxu0 0.0
    %641 = vmatprep.subr.mxu0 0.0
    %642 = vmatpush2.msra.mxu0 0.0
    %643 = vmatprep.subr.mxu0 0.0
    %644 = vmatpush2.msra.mxu0 0.0
    %645 = vmatprep.subr.mxu0 0.0
    %646 = vmatpush2.msra.mxu0 0.0
    %647 = vmatprep.subr.mxu0 0.0
    %648 = vmatpush2.msra.mxu0 0.0
    %649 = vmatprep.subr.mxu0 0.0
    %650 = vmatpush2.msra.mxu0 0.0
    %651 = vmatprep.subr.mxu0 0.0
    %652 = vmatpush2.msra.mxu0 0.0
    %653 = vmatprep.subr.mxu0 0.0
    %654 = vmatpush2.msra.mxu0 0.0
    %655 = vmatprep.subr.mxu0 0.0
    %656 = vmatpush2.msra.mxu0 0.0
    %657 = vmatprep.subr.mxu0 0.0
    %658 = vmatpush2.msra.mxu0 0.0
    %659 = vmatprep.subr.mxu0 0.0
    %660 = vmatpush2.msra.mxu0 0.0
    %661 = vmatprep.subr.mxu0 0.0
    %662 = vmatpush2.msra.mxu0 0.0
    %663 = vmatprep.subr.mxu0 0.0
    %664 = vmatpush2.msra.mxu0 0.0
    %665 = vmatprep.subr.mxu0 0.0
    %666 = vmatpush2.msra.mxu0 0.0
    %667 = vmatprep.subr.mxu0 0.0
    %668 = vmatpush2.msra.mxu0 0.0
    %669 = vmatprep.mubr.f32.mxu0 0.0
    %670 = vmatmul.mubr.f32.gmra.mxu0 %v312
    %v671 = vpop.f32.mrf.mxu0
    %v672 = vadd.f32 0.0, %v671
    %v673 = vpop.f32.mrf.mxu0
    %v674 = vadd.f32 0.0, %v673
    %675 = vmatprep.mubr.f32.mxu0 0.0
    %676 = vmatmul.mubr.f32.gmra.mxu0 %v315
    %v677 = vpop.f32.mrf.mxu0
    %v678 = vadd.f32 0.0, %v677
    %v679 = vpop.f32.mrf.mxu0
    %v680 = vadd.f32 0.0, %v679
    %681 = vdwg.mxu0
    %682 = vmatprep.subr.mxu0 0.0
    %683 = vmatpush1.msra.mxu0 0.0
    %684 = vmatprep.subr.mxu0 0.0
    %685 = vmatpush1.msra.mxu0 0.0
    %686 = vmatprep.subr.mxu0 0.0
    %687 = vmatpush1.msra.mxu0 0.0
    %688 = vmatprep.subr.mxu0 0.0
    %689 = vmatpush1.msra.mxu0 0.0
    %690 = vmatprep.subr.mxu0 0.0
    %691 = vmatpush1.msra.mxu0 0.0
    %692 = vmatprep.subr.mxu0 0.0
    %693 = vmatpush1.msra.mxu0 0.0
    %694 = vmatprep.subr.mxu0 0.0
    %695 = vmatpush1.msra.mxu0 0.0
    %696 = vmatprep.subr.mxu0 0.0
    %697 = vmatpush1.msra.mxu0 0.0
    %698 = vmatprep.subr.mxu0 0.0
    %699 = vmatpush1.msra.mxu0 0.0
    %700 = vmatprep.subr.mxu0 0.0
    %701 = vmatpush1.msra.mxu0 0.0
    %702 = vmatprep.subr.mxu0 0.0
    %703 = vmatpush1.msra.mxu0 0.0
    %704 = vmatprep.subr.mxu0 0.0
    %705 = vmatpush1.msra.mxu0 0.0
    %706 = vmatprep.subr.mxu0 0.0
    %707 = vmatpush1.msra.mxu0 0.0
    %708 = vmatprep.subr.mxu0 0.0
    %709 = vmatpush1.msra.mxu0 0.0
    %710 = vmatprep.subr.mxu0 %v604
    %711 = vmatpush1.msra.mxu0 %v603
    %712 = vmatprep.subr.mxu0 %v602
    %713 = vmatpush1.msra.mxu0 %v601
    %714 = vmatprep.subr.mxu0 0.0
    %715 = vmatpush2.msra.mxu0 0.0
    %716 = vmatprep.subr.mxu0 0.0
    %717 = vmatpush2.msra.mxu0 0.0
    %718 = vmatprep.subr.mxu0 0.0
    %719 = vmatpush2.msra.mxu0 0.0
    %720 = vmatprep.subr.mxu0 0.0
    %721 = vmatpush2.msra.mxu0 0.0
    %722 = vmatprep.subr.mxu0 0.0
    %723 = vmatpush2.msra.mxu0 0.0
    %724 = vmatprep.subr.mxu0 0.0
    %725 = vmatpush2.msra.mxu0 0.0
    %726 = vmatprep.subr.mxu0 0.0
    %727 = vmatpush2.msra.mxu0 0.0
    %728 = vmatprep.subr.mxu0 0.0
    %729 = vmatpush2.msra.mxu0 0.0
    %730 = vmatprep.subr.mxu0 0.0
    %731 = vmatpush2.msra.mxu0 0.0
    %732 = vmatprep.subr.mxu0 0.0
    %733 = vmatpush2.msra.mxu0 0.0
    %734 = vmatprep.subr.mxu0 0.0
    %735 = vmatpush2.msra.mxu0 0.0
    %736 = vmatprep.subr.mxu0 0.0
    %737 = vmatpush2.msra.mxu0 0.0
    %738 = vmatprep.subr.mxu0 0.0
    %739 = vmatpush2.msra.mxu0 0.0
    %740 = vmatprep.subr.mxu0 0.0
    %741 = vmatpush2.msra.mxu0 0.0
    %742 = vmatprep.subr.mxu0 0.0
    %743 = vmatpush2.msra.mxu0 0.0
    %744 = vmatprep.subr.mxu0 0.0
    %745 = vmatpush2.msra.mxu0 0.0
    %746 = vmatprep.mubr.f32.mxu0 0.0
    %747 = vmatmul.mubr.f32.gmra.mxu0 %v395
    %v748 = vpop.f32.mrf.mxu0
    %v749 = vadd.f32 0.0, %v748
    %v750 = vpop.f32.mrf.mxu0
    %v751 = vadd.f32 0.0, %v750
    %752 = vmatprep.mubr.f32.mxu0 0.0
    %753 = vmatmul.mubr.f32.gmra.mxu0 %v398
    %v754 = vpop.f32.mrf.mxu0
    %v755 = vadd.f32 0.0, %v754
    %v756 = vpop.f32.mrf.mxu0
    %v757 = vadd.f32 0.0, %v756
    %758 = vdwg.mxu0
    %v759 = vadd.f32 %v588, %v601
    %v760 = vadd.f32 %v589, %v602
    %v761 = vadd.f32 %v590, %v603
    %v762 = vadd.f32 %v591, %v604
    %v764 = vsel %vm310, %v300, 0
    %v767 = vsel %vm310, %v301, 0
    %769 = vmatprep.subr.mxu0 0.0
    %770 = vmatpush1.msra.mxu0 0.0
    %771 = vmatprep.subr.mxu0 0.0
    %772 = vmatpush1.msra.mxu0 0.0
    %773 = vmatprep.subr.mxu0 0.0
    %774 = vmatpush1.msra.mxu0 0.0
    %775 = vmatprep.subr.mxu0 0.0
    %776 = vmatpush1.msra.mxu0 0.0
    %777 = vmatprep.subr.mxu0 0.0
    %778 = vmatpush1.msra.mxu0 0.0
    %779 = vmatprep.subr.mxu0 0.0
    %780 = vmatpush1.msra.mxu0 0.0
    %781 = vmatprep.subr.mxu0 0.0
    %782 = vmatpush1.msra.mxu0 0.0
    %783 = vmatprep.subr.mxu0 0.0
    %784 = vmatpush1.msra.mxu0 0.0
    %785 = vmatprep.subr.mxu0 0.0
    %786 = vmatpush1.msra.mxu0 0.0
    %787 = vmatprep.subr.mxu0 0.0
    %788 = vmatpush1.msra.mxu0 0.0
    %789 = vmatprep.subr.mxu0 0.0
    %790 = vmatpush1.msra.mxu0 0.0
    %791 = vmatprep.subr.mxu0 0.0
    %792 = vmatpush1.msra.mxu0 0.0
    %793 = vmatprep.subr.mxu0 0.0
    %794 = vmatpush1.msra.mxu0 0.0
    %795 = vmatprep.subr.mxu0 0.0
    %796 = vmatpush1.msra.mxu0 0.0
    %797 = vmatprep.subr.mxu0 %v762
    %798 = vmatpush1.msra.mxu0 %v761
    %799 = vmatprep.subr.mxu0 %v760
    %800 = vmatpush1.msra.mxu0 %v759
    %801 = vmatprep.subr.mxu0 0.0
    %802 = vmatpush2.msra.mxu0 0.0
    %803 = vmatprep.subr.mxu0 0.0
    %804 = vmatpush2.msra.mxu0 0.0
    %805 = vmatprep.subr.mxu0 0.0
    %806 = vmatpush2.msra.mxu0 0.0
    %807 = vmatprep.subr.mxu0 0.0
    %808 = vmatpush2.msra.mxu0 0.0
    %809 = vmatprep.subr.mxu0 0.0
    %810 = vmatpush2.msra.mxu0 0.0
    %811 = vmatprep.subr.mxu0 0.0
    %812 = vmatpush2.msra.mxu0 0.0
    %813 = vmatprep.subr.mxu0 0.0
    %814 = vmatpush2.msra.mxu0 0.0
    %815 = vmatprep.subr.mxu0 0.0
    %816 = vmatpush2.msra.mxu0 0.0
    %817 = vmatprep.subr.mxu0 0.0
    %818 = vmatpush2.msra.mxu0 0.0
    %819 = vmatprep.subr.mxu0 0.0
    %820 = vmatpush2.msra.mxu0 0.0
    %821 = vmatprep.subr.mxu0 0.0
    %822 = vmatpush2.msra.mxu0 0.0
    %823 = vmatprep.subr.mxu0 0.0
    %824 = vmatpush2.msra.mxu0 0.0
    %825 = vmatprep.subr.mxu0 0.0
    %826 = vmatpush2.msra.mxu0 0.0
    %827 = vmatprep.subr.mxu0 0.0
    %828 = vmatpush2.msra.mxu0 0.0
    %829 = vmatprep.subr.mxu0 0.0
    %830 = vmatpush2.msra.mxu0 0.0
    %831 = vmatprep.subr.mxu0 0.0
    %832 = vmatpush2.msra.mxu0 0.0
    %833 = vmatprep.mubr.f32.mxu0 0.0
    %834 = vmatmul.mubr.f32.gmra.mxu0 %v764
    %v835 = vpop.f32.mrf.mxu0
    %v836 = vadd.f32 0.0, %v835
    %v837 = vpop.f32.mrf.mxu0
    %v838 = vadd.f32 0.0, %v837
    %839 = vmatprep.mubr.f32.mxu0 0.0
    %840 = vmatmul.mubr.f32.gmra.mxu0 %v767
    %v841 = vpop.f32.mrf.mxu0
    %v842 = vadd.f32 0.0, %v841
    %v843 = vpop.f32.mrf.mxu0
    %v844 = vadd.f32 0.0, %v843
    %845 = vdwg.mxu0
    %v846 = vadd.f32 %v672, %v749
    %v847 = vadd.f32 %v674, %v751
    %v848 = vadd.f32 %v678, %v755
    %v849 = vadd.f32 %v680, %v757
    %v850 = vsub.f32 %v836, %v672
    %v851 = vsub.f32 %v838, %v674
    %v852 = vsub.f32 %v842, %v678
    %v853 = vsub.f32 %v844, %v680
    %v854 = vadd.f32 %v850, %v749
    %v855 = vadd.f32 %v851, %v751
    %v856 = vadd.f32 %v852, %v755
    %v857 = vadd.f32 %v853, %v757
    %v858 = vld [vmem:[#allocation11] sm:$0xff]
    %v859 = vld [vmem:[#allocation11 + $0x8] sm:$0xff]
    %v860 = vld [vmem:[#allocation11 + $0x10] sm:$0xff]
    %v861 = vld [vmem:[#allocation11 + $0x18] sm:$0xff]
    %v862 = vld [vmem:[#allocation11 + $0x20] sm:$0xff]
    %v863 = vld [vmem:[#allocation11 + $0x28] sm:$0xff]
    %v864 = vld [vmem:[#allocation11 + $0x30] sm:$0xff]
    %v865 = vld [vmem:[#allocation11 + $0x38] sm:$0xff]
    %v866 = vld [vmem:[#allocation11 + $0x40] sm:$0xff]
    %v867 = vld [vmem:[#allocation11 + $0x48] sm:$0xff]
    %v868 = vld [vmem:[#allocation11 + $0x50] sm:$0xff]
    %v869 = vld [vmem:[#allocation11 + $0x58] sm:$0xff]
    %v870 = vld [vmem:[#allocation11 + $0x60] sm:$0xff]
    %v871 = vld [vmem:[#allocation11 + $0x68] sm:$0xff]
    %v872 = vld [vmem:[#allocation11 + $0x70] sm:$0xff]
    %v873 = vld [vmem:[#allocation11 + $0x78] sm:$0xff]
    %s874 = scalar_lea.vmem [#allocation11], 128
    %v875 = vld [vmem:[%s874] sm:$0xff]
    %v876 = vld [vmem:[%s874 + $0x8] sm:$0xff]
    %v877 = vld [vmem:[%s874 + $0x10] sm:$0xff]
    %v878 = vld [vmem:[%s874 + $0x18] sm:$0xff]
    %v879 = vld [vmem:[%s874 + $0x20] sm:$0xff]
    %v880 = vld [vmem:[%s874 + $0x28] sm:$0xff]
    %v881 = vld [vmem:[%s874 + $0x30] sm:$0xff]
    %v882 = vld [vmem:[%s874 + $0x38] sm:$0xff]
    %v883 = vld [vmem:[%s874 + $0x40] sm:$0xff]
    %v884 = vld [vmem:[%s874 + $0x48] sm:$0xff]
    %v885 = vld [vmem:[%s874 + $0x50] sm:$0xff]
    %v886 = vld [vmem:[%s874 + $0x58] sm:$0xff]
    %v887 = vld [vmem:[%s874 + $0x60] sm:$0xff]
    %v888 = vld [vmem:[%s874 + $0x68] sm:$0xff]
    %v889 = vld [vmem:[%s874 + $0x70] sm:$0xff]
    %v890 = vld [vmem:[%s874 + $0x78] sm:$0xff]
    %891 = vmatprep.subr.mxu0 0.0
    %892 = vmatpush1.msra.mxu0 %v890
    %893 = vmatprep.subr.mxu0 0.0
    %894 = vmatpush1.msra.mxu0 %v889
    %895 = vmatprep.subr.mxu0 0.0
    %896 = vmatpush1.msra.mxu0 %v888
    %897 = vmatprep.subr.mxu0 0.0
    %898 = vmatpush1.msra.mxu0 %v887
    %899 = vmatprep.subr.mxu0 0.0
    %900 = vmatpush1.msra.mxu0 %v886
    %901 = vmatprep.subr.mxu0 0.0
    %902 = vmatpush1.msra.mxu0 %v885
    %903 = vmatprep.subr.mxu0 0.0
    %904 = vmatpush1.msra.mxu0 %v884
    %905 = vmatprep.subr.mxu0 0.0
    %906 = vmatpush1.msra.mxu0 %v883
    %907 = vmatprep.subr.mxu0 0.0
    %908 = vmatpush1.msra.mxu0 %v882
    %909 = vmatprep.subr.mxu0 0.0
    %910 = vmatpush1.msra.mxu0 %v881
    %911 = vmatprep.subr.mxu0 0.0
    %912 = vmatpush1.msra.mxu0 %v880
    %913 = vmatprep.subr.mxu0 0.0
    %914 = vmatpush1.msra.mxu0 %v879
    %915 = vmatprep.subr.mxu0 0.0
    %916 = vmatpush1.msra.mxu0 %v878
    %917 = vmatprep.subr.mxu0 0.0
    %918 = vmatpush1.msra.mxu0 %v877
    %919 = vmatprep.subr.mxu0 0.0
    %920 = vmatpush1.msra.mxu0 %v876
    %921 = vmatprep.subr.mxu0 0.0
    %922 = vmatpush1.msra.mxu0 %v875
    %923 = vmatprep.subr.mxu0 0.0
    %924 = vmatpush2.msra.mxu0 0.0
    %925 = vmatprep.subr.mxu0 0.0
    %926 = vmatpush2.msra.mxu0 0.0
    %927 = vmatprep.subr.mxu0 0.0
    %928 = vmatpush2.msra.mxu0 0.0
    %929 = vmatprep.subr.mxu0 0.0
    %930 = vmatpush2.msra.mxu0 0.0
    %931 = vmatprep.subr.mxu0 0.0
    %932 = vmatpush2.msra.mxu0 0.0
    %933 = vmatprep.subr.mxu0 0.0
    %934 = vmatpush2.msra.mxu0 0.0
    %935 = vmatprep.subr.mxu0 0.0
    %936 = vmatpush2.msra.mxu0 0.0
    %937 = vmatprep.subr.mxu0 0.0
    %938 = vmatpush2.msra.mxu0 0.0
    %939 = vmatprep.subr.mxu0 0.0
    %940 = vmatpush2.msra.mxu0 0.0
    %941 = vmatprep.subr.mxu0 0.0
    %942 = vmatpush2.msra.mxu0 0.0
    %943 = vmatprep.subr.mxu0 0.0
    %944 = vmatpush2.msra.mxu0 0.0
    %945 = vmatprep.subr.mxu0 0.0
    %946 = vmatpush2.msra.mxu0 0.0
    %947 = vmatprep.subr.mxu0 0.0
    %948 = vmatpush2.msra.mxu0 0.0
    %949 = vmatprep.subr.mxu0 0.0
    %950 = vmatpush2.msra.mxu0 0.0
    %951 = vmatprep.subr.mxu0 0.0
    %952 = vmatpush2.msra.mxu0 0.0
    %953 = vmatprep.subr.mxu0 0.0
    %954 = vmatpush2.msra.mxu0 0.0
    %955 = vmatprep.mubr.f32.mxu0 0.0
    %956 = vmatmul.mubr.f32.gmra.mxu0 %v854
    %v957 = vpop.f32.mrf.mxu0
    %v958 = vadd.f32 0.0, %v957
    %v959 = vpop.f32.mrf.mxu0
    %960 = vmatprep.mubr.f32.mxu0 0.0
    %961 = vmatmul.mubr.f32.gmra.mxu0 %v856
    %v962 = vpop.f32.mrf.mxu0
    %v963 = vadd.f32 0.0, %v962
    %v964 = vpop.f32.mrf.mxu0
    %965 = vdwg.mxu0
    %966 = vmatprep.subr.mxu0 0.0
    %967 = vmatpush1.msra.mxu0 %v873
    %968 = vmatprep.subr.mxu0 0.0
    %969 = vmatpush1.msra.mxu0 %v872
    %970 = vmatprep.subr.mxu0 0.0
    %971 = vmatpush1.msra.mxu0 %v871
    %972 = vmatprep.subr.mxu0 0.0
    %973 = vmatpush1.msra.mxu0 %v870
    %974 = vmatprep.subr.mxu0 0.0
    %975 = vmatpush1.msra.mxu0 %v869
    %976 = vmatprep.subr.mxu0 0.0
    %977 = vmatpush1.msra.mxu0 %v868
    %978 = vmatprep.subr.mxu0 0.0
    %979 = vmatpush1.msra.mxu0 %v867
    %980 = vmatprep.subr.mxu0 0.0
    %981 = vmatpush1.msra.mxu0 %v866
    %982 = vmatprep.subr.mxu0 0.0
    %983 = vmatpush1.msra.mxu0 %v865
    %984 = vmatprep.subr.mxu0 0.0
    %985 = vmatpush1.msra.mxu0 %v864
    %986 = vmatprep.subr.mxu0 0.0
    %987 = vmatpush1.msra.mxu0 %v863
    %988 = vmatprep.subr.mxu0 0.0
    %989 = vmatpush1.msra.mxu0 %v862
    %990 = vmatprep.subr.mxu0 0.0
    %991 = vmatpush1.msra.mxu0 %v861
    %992 = vmatprep.subr.mxu0 0.0
    %993 = vmatpush1.msra.mxu0 %v860
    %994 = vmatprep.subr.mxu0 0.0
    %995 = vmatpush1.msra.mxu0 %v859
    %996 = vmatprep.subr.mxu0 0.0
    %997 = vmatpush1.msra.mxu0 %v858
    %998 = vmatprep.subr.mxu0 0.0
    %999 = vmatpush2.msra.mxu0 0.0
    %1000 = vmatprep.subr.mxu0 0.0
    %1001 = vmatpush2.msra.mxu0 0.0
    %1002 = vmatprep.subr.mxu0 0.0
    %1003 = vmatpush2.msra.mxu0 0.0
    %1004 = vmatprep.subr.mxu0 0.0
    %1005 = vmatpush2.msra.mxu0 0.0
    %1006 = vmatprep.subr.mxu0 0.0
    %1007 = vmatpush2.msra.mxu0 0.0
    %1008 = vmatprep.subr.mxu0 0.0
    %1009 = vmatpush2.msra.mxu0 0.0
    %1010 = vmatprep.subr.mxu0 0.0
    %1011 = vmatpush2.msra.mxu0 0.0
    %1012 = vmatprep.subr.mxu0 0.0
    %1013 = vmatpush2.msra.mxu0 0.0
    %1014 = vmatprep.subr.mxu0 0.0
    %1015 = vmatpush2.msra.mxu0 0.0
    %1016 = vmatprep.subr.mxu0 0.0
    %1017 = vmatpush2.msra.mxu0 0.0
    %1018 = vmatprep.subr.mxu0 0.0
    %1019 = vmatpush2.msra.mxu0 0.0
    %1020 = vmatprep.subr.mxu0 0.0
    %1021 = vmatpush2.msra.mxu0 0.0
    %1022 = vmatprep.subr.mxu0 0.0
    %1023 = vmatpush2.msra.mxu0 0.0
    %1024 = vmatprep.subr.mxu0 0.0
    %1025 = vmatpush2.msra.mxu0 0.0
    %1026 = vmatprep.subr.mxu0 0.0
    %1027 = vmatpush2.msra.mxu0 0.0
    %1028 = vmatprep.subr.mxu0 0.0
    %1029 = vmatpush2.msra.mxu0 0.0
    %1030 = vmatprep.mubr.f32.mxu0 0.0
    %1031 = vmatmul.mubr.f32.gmra.mxu0 %v846
    %v1032 = vpop.f32.mrf.mxu0
    %v1033 = vadd.f32 %v958, %v1032
    %v1034 = vpop.f32.mrf.mxu0
    %1035 = vmatprep.mubr.f32.mxu0 0.0
    %1036 = vmatmul.mubr.f32.gmra.mxu0 %v848
    %v1037 = vpop.f32.mrf.mxu0
    %v1038 = vadd.f32 %v963, %v1037
    %v1039 = vpop.f32.mrf.mxu0
    %1040 = vdwg.mxu0
    %1041 = vst [vmem:[#allocation12] sm:$0xff] %v1033
    %1042 = vst [vmem:[#allocation12 + $0x10] sm:$0xff] %v1038
    %1043 = vmatprep.subr.mxu0 0.0
    %1044 = vmatpush1.msra.mxu0 %v890
    %1045 = vmatprep.subr.mxu0 0.0
    %1046 = vmatpush1.msra.mxu0 %v889
    %1047 = vmatprep.subr.mxu0 0.0
    %1048 = vmatpush1.msra.mxu0 %v888
    %1049 = vmatprep.subr.mxu0 0.0
    %1050 = vmatpush1.msra.mxu0 %v887
    %1051 = vmatprep.subr.mxu0 0.0
    %1052 = vmatpush1.msra.mxu0 %v886
    %1053 = vmatprep.subr.mxu0 0.0
    %1054 = vmatpush1.msra.mxu0 %v885
    %1055 = vmatprep.subr.mxu0 0.0
    %1056 = vmatpush1.msra.mxu0 %v884
    %1057 = vmatprep.subr.mxu0 0.0
    %1058 = vmatpush1.msra.mxu0 %v883
    %1059 = vmatprep.subr.mxu0 0.0
    %1060 = vmatpush1.msra.mxu0 %v882
    %1061 = vmatprep.subr.mxu0 0.0
    %1062 = vmatpush1.msra.mxu0 %v881
    %1063 = vmatprep.subr.mxu0 0.0
    %1064 = vmatpush1.msra.mxu0 %v880
    %1065 = vmatprep.subr.mxu0 0.0
    %1066 = vmatpush1.msra.mxu0 %v879
    %1067 = vmatprep.subr.mxu0 0.0
    %1068 = vmatpush1.msra.mxu0 %v878
    %1069 = vmatprep.subr.mxu0 0.0
    %1070 = vmatpush1.msra.mxu0 %v877
    %1071 = vmatprep.subr.mxu0 0.0
    %1072 = vmatpush1.msra.mxu0 %v876
    %1073 = vmatprep.subr.mxu0 0.0
    %1074 = vmatpush1.msra.mxu0 %v875
    %1075 = vmatprep.subr.mxu0 0.0
    %1076 = vmatpush2.msra.mxu0 0.0
    %1077 = vmatprep.subr.mxu0 0.0
    %1078 = vmatpush2.msra.mxu0 0.0
    %1079 = vmatprep.subr.mxu0 0.0
    %1080 = vmatpush2.msra.mxu0 0.0
    %1081 = vmatprep.subr.mxu0 0.0
    %1082 = vmatpush2.msra.mxu0 0.0
    %1083 = vmatprep.subr.mxu0 0.0
    %1084 = vmatpush2.msra.mxu0 0.0
    %1085 = vmatprep.subr.mxu0 0.0
    %1086 = vmatpush2.msra.mxu0 0.0
    %1087 = vmatprep.subr.mxu0 0.0
    %1088 = vmatpush2.msra.mxu0 0.0
    %1089 = vmatprep.subr.mxu0 0.0
    %1090 = vmatpush2.msra.mxu0 0.0
    %1091 = vmatprep.subr.mxu0 0.0
    %1092 = vmatpush2.msra.mxu0 0.0
    %1093 = vmatprep.subr.mxu0 0.0
    %1094 = vmatpush2.msra.mxu0 0.0
    %1095 = vmatprep.subr.mxu0 0.0
    %1096 = vmatpush2.msra.mxu0 0.0
    %1097 = vmatprep.subr.mxu0 0.0
    %1098 = vmatpush2.msra.mxu0 0.0
    %1099 = vmatprep.subr.mxu0 0.0
    %1100 = vmatpush2.msra.mxu0 0.0
    %1101 = vmatprep.subr.mxu0 0.0
    %1102 = vmatpush2.msra.mxu0 0.0
    %1103 = vmatprep.subr.mxu0 0.0
    %1104 = vmatpush2.msra.mxu0 0.0
    %1105 = vmatprep.subr.mxu0 0.0
    %1106 = vmatpush2.msra.mxu0 0.0
    %1107 = vmatprep.mubr.f32.mxu0 0.0
    %1108 = vmatmul.mubr.f32.gmra.mxu0 %v855
    %v1109 = vpop.f32.mrf.mxu0
    %v1110 = vadd.f32 0.0, %v1109
    %v1111 = vpop.f32.mrf.mxu0
    %1112 = vmatprep.mubr.f32.mxu0 0.0
    %1113 = vmatmul.mubr.f32.gmra.mxu0 %v857
    %v1114 = vpop.f32.mrf.mxu0
    %v1115 = vadd.f32 0.0, %v1114
    %v1116 = vpop.f32.mrf.mxu0
    %1117 = vdwg.mxu0
    %1118 = vmatprep.subr.mxu0 0.0
    %1119 = vmatpush1.msra.mxu0 %v873
    %1120 = vmatprep.subr.mxu0 0.0
    %1121 = vmatpush1.msra.mxu0 %v872
    %1122 = vmatprep.subr.mxu0 0.0
    %1123 = vmatpush1.msra.mxu0 %v871
    %1124 = vmatprep.subr.mxu0 0.0
    %1125 = vmatpush1.msra.mxu0 %v870
    %1126 = vmatprep.subr.mxu0 0.0
    %1127 = vmatpush1.msra.mxu0 %v869
    %1128 = vmatprep.subr.mxu0 0.0
    %1129 = vmatpush1.msra.mxu0 %v868
    %1130 = vmatprep.subr.mxu0 0.0
    %1131 = vmatpush1.msra.mxu0 %v867
    %1132 = vmatprep.subr.mxu0 0.0
    %1133 = vmatpush1.msra.mxu0 %v866
    %1134 = vmatprep.subr.mxu0 0.0
    %1135 = vmatpush1.msra.mxu0 %v865
    %1136 = vmatprep.subr.mxu0 0.0
    %1137 = vmatpush1.msra.mxu0 %v864
    %1138 = vmatprep.subr.mxu0 0.0
    %1139 = vmatpush1.msra.mxu0 %v863
    %1140 = vmatprep.subr.mxu0 0.0
    %1141 = vmatpush1.msra.mxu0 %v862
    %1142 = vmatprep.subr.mxu0 0.0
    %1143 = vmatpush1.msra.mxu0 %v861
    %1144 = vmatprep.subr.mxu0 0.0
    %1145 = vmatpush1.msra.mxu0 %v860
    %1146 = vmatprep.subr.mxu0 0.0
    %1147 = vmatpush1.msra.mxu0 %v859
    %1148 = vmatprep.subr.mxu0 0.0
    %1149 = vmatpush1.msra.mxu0 %v858
    %1150 = vmatprep.subr.mxu0 0.0
    %1151 = vmatpush2.msra.mxu0 0.0
    %1152 = vmatprep.subr.mxu0 0.0
    %1153 = vmatpush2.msra.mxu0 0.0
    %1154 = vmatprep.subr.mxu0 0.0
    %1155 = vmatpush2.msra.mxu0 0.0
    %1156 = vmatprep.subr.mxu0 0.0
    %1157 = vmatpush2.msra.mxu0 0.0
    %1158 = vmatprep.subr.mxu0 0.0
    %1159 = vmatpush2.msra.mxu0 0.0
    %1160 = vmatprep.subr.mxu0 0.0
    %1161 = vmatpush2.msra.mxu0 0.0
    %1162 = vmatprep.subr.mxu0 0.0
    %1163 = vmatpush2.msra.mxu0 0.0
    %1164 = vmatprep.subr.mxu0 0.0
    %1165 = vmatpush2.msra.mxu0 0.0
    %1166 = vmatprep.subr.mxu0 0.0
    %1167 = vmatpush2.msra.mxu0 0.0
    %1168 = vmatprep.subr.mxu0 0.0
    %1169 = vmatpush2.msra.mxu0 0.0
    %1170 = vmatprep.subr.mxu0 0.0
    %1171 = vmatpush2.msra.mxu0 0.0
    %1172 = vmatprep.subr.mxu0 0.0
    %1173 = vmatpush2.msra.mxu0 0.0
    %1174 = vmatprep.subr.mxu0 0.0
    %1175 = vmatpush2.msra.mxu0 0.0
    %1176 = vmatprep.subr.mxu0 0.0
    %1177 = vmatpush2.msra.mxu0 0.0
    %1178 = vmatprep.subr.mxu0 0.0
    %1179 = vmatpush2.msra.mxu0 0.0
    %1180 = vmatprep.subr.mxu0 0.0
    %1181 = vmatpush2.msra.mxu0 0.0
    %1182 = vmatprep.mubr.f32.mxu0 0.0
    %1183 = vmatmul.mubr.f32.gmra.mxu0 %v847
    %v1184 = vpop.f32.mrf.mxu0
    %v1185 = vadd.f32 %v1110, %v1184
    %v1186 = vpop.f32.mrf.mxu0
    %1187 = vmatprep.mubr.f32.mxu0 0.0
    %1188 = vmatmul.mubr.f32.gmra.mxu0 %v849
    %v1189 = vpop.f32.mrf.mxu0
    %v1190 = vadd.f32 %v1115, %v1189
    %v1191 = vpop.f32.mrf.mxu0
    %1192 = vdwg.mxu0
    %1193 = vst [vmem:[#allocation12 + $0x8] sm:$0xff] %v1185
    %1194 = vst [vmem:[#allocation12 + $0x18] sm:$0xff] %v1190
    // Predicated region
    $region46: #{tpu_custom_call.1} parent=1 // pred_check
      _
    $region47: #{tpu_custom_call.1} parent=1 // pred_check_branch
      %1196 = sbr.rel (0) target = $region49
    $region48: #{tpu_custom_call.1} parent=1 // pred_region
      %s1198 = ssub.s32 512, 512
      %1199 = vsyncadd [#allocation5], %s1198
      %s1200 = sshll.u32 [#allocation12], 4
      %s1201 = int_to_ptr.vmem [resolvable:$true] %s1200
      %1206 = dma.vmem_to_hbm [thread:$0]  %s1201, 512, %s6, [#allocation5], 256, 256, 16
    $region49: #{tpu_custom_call.1} parent=1 // pred_fallthru
      _
    // Predicated region
    $region50: #{tpu_custom_call.1} parent=1 // pred_check
      _
    $region51: #{tpu_custom_call.1} parent=1 // pred_check_branch
      %1208 = sbr.rel (0) target = $region53
    $region52: #{tpu_custom_call.1} parent=1 // pred_region
      %1209 = dma.done [#allocation5], 512
    $region53: #{tpu_custom_call.1} parent=1 // pred_fallthru
      _
    %1210 = vsyncpa [#allocation4], 1
    %1211 = vsyncpa [#allocation7], 1
    %1212 = vsyncpa [#allocation10], 1
    %1213 = vsyncpa [#allocation5], 1

// kernel: tpu_custom_call.1
$region0: #{tpu_custom_call.1}
  #allocation0 [shape = 'u32[]', space=smem, size = 0x4, offset = 0x4, fixed_abs, tag = 'smem constant byte address 0x4 - core index']
  #allocation1 [shape = 'u32[144,128]{1,0:T(1,128)}', space=vmem, size = 0x12000, scoped, tag = 'internal scratch']
  #allocation2 [shape = 'f32[2,16,256]{2,1,0:T(8,128)}', space=vmem, size = 0x8000, scoped, tag = 'scratch operand']
  %s0 = inlined_call_operand.hbm [shape: f32[16,256], index: 0, kind: input, shape index: {}, may-alias: {0,6}]
  %s1 = inlined_call_operand.vmem [shape: f32[2,16,256], index: 1, kind: input, shape index: {}]
  %s2 = inlined_call_operand.hbm [shape: f32[16,256], index: 2, kind: input, shape index: {}]
  %s3 = inlined_call_operand.hbm [shape: f32[4,16,16], index: 3, kind: input, shape index: {}]
  %s4 = inlined_call_operand.hbm [shape: f32[128,256], index: 4, kind: input, shape index: {}]
  %s5 = inlined_call_operand.hbm [shape: f32[2,128,128], index: 5, kind: input, shape index: {}]
  %s6 = inlined_call_operand.hbm [shape: f32[16,256], index: 6, kind: output, shape index: {}, may-alias: {0,6}]
  %s7 = sld [smem:[#allocation0]]
  $region54: #{tpu_custom_call.1} parent=0
    _
  %s9 = ssub.s32 1, %s7
  %s10 = scalar_select 0, %s9, %s7
  $region1: #{tpu_custom_call.1} parent=0
    #allocation3 [shape = 'u8[16384]{0}', space=vmem, size = 0x4000, scoped, tag = 'input window, operand 0, single buffered']
    #allocation4 [shape = 's32[1]{0}', space=sflag, size = 0x4, scoped, tag = 'scoped memory for tpu_custom_call.1']
    #allocation5 [shape = 's32[1]{0}', space=sflag, size = 0x4, scoped, tag = 'scoped memory for tpu_custom_call.1']
    #allocation6 [shape = 'u8[16384]{0}', space=vmem, size = 0x4000, scoped, tag = 'input window, operand 2, single buffered']
    #allocation7 [shape = 's32[1]{0}', space=sflag, size = 0x4, scoped, tag = 'scoped memory for tpu_custom_call.1']
    #allocation8 [shape = 'u8[32768]{0}', space=vmem, size = 0x8000, scoped, tag = 'input window, operand 3, single buffered']
    #allocation9 [shape = 'u8[131072]{0}', space=vmem, size = 0x20000, scoped, tag = 'input window, operand 4, single buffered']
    #allocation10 [shape = 's32[1]{0}', space=sflag, size = 0x4, scoped, tag = 'scoped memory for tpu_custom_call.1']
    #allocation11 [shape = 'u8[131072]{0}', space=vmem, size = 0x20000, scoped, tag = 'input window, operand 5, single buffered']
    #allocation12 [shape = 'u8[16384]{0}', space=vmem, size = 0x4000, scoped, tag = 'output window, operand 0, single buffered']
    %11 = vsyncpa [#allocation4], 0
    %12 = vsyncpa [#allocation7], 0
    %13 = vsyncpa [#allocation10], 0
    %14 = vsyncpa [#allocation5], 0
    // Predicated region
    $region2: #{tpu_custom_call.1} parent=1 // pred_check
      _
    $region3: #{tpu_custom_call.1} parent=1 // pred_check_branch
      %16 = sbr.rel (0) target = $region5
    $region4: #{tpu_custom_call.1} parent=1 // pred_region
      %s18 = ssub.s32 512, 512
      %19 = vsyncadd [#allocation4], %s18
      %s20 = sshll.u32 [#allocation3], 4
      %s21 = int_to_ptr.vmem [resolvable:$true] %s20
      %26 = dma.hbm_to_vmem [thread:$0]  %s0, 512, %s21, [#allocation4], 256, 256, 16
    $region5: #{tpu_custom_call.1} parent=1 // pred_fallthru
      _
    // Predicated region
    $region6: #{tpu_custom_call.1} parent=1 // pred_check
      _
    $region7: #{tpu_custom_call.1} parent=1 // pred_check_branch
      %28 = sbr.rel (0) target = $region9
    $region8: #{tpu_custom_call.1} parent=1 // pred_region
      _
    $region9: #{tpu_custom_call.1} parent=1 // pred_fallthru
      _
    // Predicated region
    $region10: #{tpu_custom_call.1} parent=1 // pred_check
      _
    $region11: #{tpu_custom_call.1} parent=1 // pred_check_branch
      %30 = sbr.rel (0) target = $region13
    $region12: #{tpu_custom_call.1} parent=1 // pred_region
      %s32 = ssub.s32 512, 512
      %33 = vsyncadd [#allocation7], %s32
      %s34 = sshll.u32 [#allocation6], 4
      %s35 = int_to_ptr.vmem [resolvable:$true] %s34
      %40 = dma.hbm_to_vmem [thread:$0]  %s2, 512, %s35, [#allocation7], 256, 256, 16
    $region13: #{tpu_custom_call.1} parent=1 // pred_fallthru
      _
    // Predicated region
    $region14: #{tpu_custom_call.1} parent=1 // pred_check
      _
    $region15: #{tpu_custom_call.1} parent=1 // pred_check_branch
      %42 = sbr.rel (0) target = $region17
    $region16: #{tpu_custom_call.1} parent=1 // pred_region
      %s44 = ssub.s32 1024, 1024
      %45 = vsyncadd [#allocation7], %s44
      %s46 = sshll.u32 [#allocation8], 4
      %s47 = int_to_ptr.vmem [resolvable:$true] %s46
      %52 = dma.hbm_to_vmem [thread:$0]  %s3, 1024, %s47, [#allocation7], 128, 128, 8
    $region17: #{tpu_custom_call.1} parent=1 // pred_fallthru
      _
    // Predicated region
    $region18: #{tpu_custom_call.1} parent=1 // pred_check
      _
    $region19: #{tpu_custom_call.1} parent=1 // pred_check_branch
      %54 = sbr.rel (0) target = $region21
    $region20: #{tpu_custom_call.1} parent=1 // pred_region
      %s56 = ssub.s32 4096, 4096
      %57 = vsyncadd [#allocation10], %s56
      %s58 = sshll.u32 [#allocation9], 4
      %s59 = int_to_ptr.vmem [resolvable:$true] %s58
      %64 = dma.hbm_to_vmem [thread:$0]  %s4, 4096, %s59, [#allocation10], 256, 256, 16
    $region21: #{tpu_custom_call.1} parent=1 // pred_fallthru
      _
    // Predicated region
    $region22: #{tpu_custom_call.1} parent=1 // pred_check
      _
    $region23: #{tpu_custom_call.1} parent=1 // pred_check_branch
      %66 = sbr.rel (0) target = $region25
    $region24: #{tpu_custom_call.1} parent=1 // pred_region
      %s68 = ssub.s32 4096, 4096
      %69 = vsyncadd [#allocation10], %s68
      %s70 = sshll.u32 [#allocation11], 4
      %s71 = int_to_ptr.vmem [resolvable:$true] %s70
      %76 = dma.hbm_to_vmem [thread:$0]  %s5, 4096, %s71, [#allocation10], 128, 128, 8
    $region25: #{tpu_custom_call.1} parent=1 // pred_fallthru
      _
    // Predicated region
    $region26: #{tpu_custom_call.1} parent=1 // pred_check
      _
    $region27: #{tpu_custom_call.1} parent=1 // pred_check_branch
      %78 = sbr.rel (0) target = $region29
    $region28: #{tpu_custom_call.1} parent=1 // pred_region
      %79 = dma.done [#allocation4], 512
    $region29: #{tpu_custom_call.1} parent=1 // pred_fallthru
      _
    // Predicated region
    $region30: #{tpu_custom_call.1} parent=1 // pred_check
      _
    $region31: #{tpu_custom_call.1} parent=1 // pred_check_branch
      %81 = sbr.rel (0) target = $region33
    $region32: #{tpu_custom_call.1} parent=1 // pred_region
      %82 = dma.done [#allocation7], 512
    $region33: #{tpu_custom_call.1} parent=1 // pred_fallthru
      _
    // Predicated region
    $region34: #{tpu_custom_call.1} parent=1 // pred_check
      _
    $region35: #{tpu_custom_call.1} parent=1 // pred_check_branch
      %84 = sbr.rel (0) target = $region37
    $region36: #{tpu_custom_call.1} parent=1 // pred_region
      %85 = dma.done [#allocation7], 1024
    $region37: #{tpu_custom_call.1} parent=1 // pred_fallthru
      _
    // Predicated region
    $region38: #{tpu_custom_call.1} parent=1 // pred_check
      _
    $region39: #{tpu_custom_call.1} parent=1 // pred_check_branch
      %87 = sbr.rel (0) target = $region41
    $region40: #{tpu_custom_call.1} parent=1 // pred_region
      %88 = dma.done [#allocation10], 4096
    $region41: #{tpu_custom_call.1} parent=1 // pred_fallthru
      _
    // Predicated region
    $region42: #{tpu_custom_call.1} parent=1 // pred_check
      _
    $region43: #{tpu_custom_call.1} parent=1 // pred_check_branch
      %90 = sbr.rel (0) target = $region45
    $region44: #{tpu_custom_call.1} parent=1 // pred_region
      %91 = dma.done [#allocation10], 4096
    $region45: #{tpu_custom_call.1} parent=1 // pred_fallthru
      _
    %v92 = vld [vmem:[#allocation9] sm:$0xff]
    %v93 = vld [vmem:[#allocation9 + $0x8] sm:$0xff]
    %v94 = vld [vmem:[#allocation9 + $0x10] sm:$0xff]
    %v95 = vld [vmem:[#allocation9 + $0x18] sm:$0xff]
    %v96 = vld [vmem:[#allocation9 + $0x20] sm:$0xff]
    %v97 = vld [vmem:[#allocation9 + $0x28] sm:$0xff]
    %v98 = vld [vmem:[#allocation9 + $0x30] sm:$0xff]
    %v99 = vld [vmem:[#allocation9 + $0x38] sm:$0xff]
    %v100 = vld [vmem:[#allocation9 + $0x40] sm:$0xff]
    %v101 = vld [vmem:[#allocation9 + $0x48] sm:$0xff]
    %v102 = vld [vmem:[#allocation9 + $0x50] sm:$0xff]
    %v103 = vld [vmem:[#allocation9 + $0x58] sm:$0xff]
    %v104 = vld [vmem:[#allocation9 + $0x60] sm:$0xff]
    %v105 = vld [vmem:[#allocation9 + $0x68] sm:$0xff]
    %v106 = vld [vmem:[#allocation9 + $0x70] sm:$0xff]
    %v107 = vld [vmem:[#allocation9 + $0x78] sm:$0xff]
    %v108 = vld [vmem:[#allocation9 + $0x80] sm:$0xff]
    %v109 = vld [vmem:[#allocation9 + $0x88] sm:$0xff]
    %v110 = vld [vmem:[#allocation9 + $0x90] sm:$0xff]
    %v111 = vld [vmem:[#allocation9 + $0x98] sm:$0xff]
    %v112 = vld [vmem:[#allocation9 + $0xa0] sm:$0xff]
    %v113 = vld [vmem:[#allocation9 + $0xa8] sm:$0xff]
    %v114 = vld [vmem:[#allocation9 + $0xb0] sm:$0xff]
    %v115 = vld [vmem:[#allocation9 + $0xb8] sm:$0xff]
    %v116 = vld [vmem:[#allocation9 + $0xc0] sm:$0xff]
    %v117 = vld [vmem:[#allocation9 + $0xc8] sm:$0xff]
    %v118 = vld [vmem:[#allocation9 + $0xd0] sm:$0xff]
    %v119 = vld [vmem:[#allocation9 + $0xd8] sm:$0xff]
    %v120 = vld [vmem:[#allocation9 + $0xe0] sm:$0xff]
    %v121 = vld [vmem:[#allocation9 + $0xe8] sm:$0xff]
    %v122 = vld [vmem:[#allocation9 + $0xf0] sm:$0xff]
    %v123 = vld [vmem:[#allocation9 + $0xf8] sm:$0xff]
    %v124 = vld [vmem:[#allocation3] sm:$0xff]
    %v125 = vld [vmem:[#allocation3 + $0x10] sm:$0xff]
    %126 = vmatprep.subr.mxu0 %v123
    %127 = vmatpush1.msra.mxu0 %v122
    %128 = vmatprep.subr.mxu0 %v121
    %129 = vmatpush1.msra.mxu0 %v120
    %130 = vmatprep.subr.mxu0 %v119
    %131 = vmatpush1.msra.mxu0 %v118
    %132 = vmatprep.subr.mxu0 %v117
    %133 = vmatpush1.msra.mxu0 %v116
    %134 = vmatprep.subr.mxu0 %v115
    %135 = vmatpush1.msra.mxu0 %v114
    %136 = vmatprep.subr.mxu0 %v113
    %137 = vmatpush1.msra.mxu0 %v112
    %138 = vmatprep.subr.mxu0 %v111
    %139 = vmatpush1.msra.mxu0 %v110
    %140 = vmatprep.subr.mxu0 %v109
    %141 = vmatpush1.msra.mxu0 %v108
    %142 = vmatprep.subr.mxu0 %v107
    %143 = vmatpush1.msra.mxu0 %v106
    %144 = vmatprep.subr.mxu0 %v105
    %145 = vmatpush1.msra.mxu0 %v104
    %146 = vmatprep.subr.mxu0 %v103
    %147 = vmatpush1.msra.mxu0 %v102
    %148 = vmatprep.subr.mxu0 %v101
    %149 = vmatpush1.msra.mxu0 %v100
    %150 = vmatprep.subr.mxu0 %v99
    %151 = vmatpush1.msra.mxu0 %v98
    %152 = vmatprep.subr.mxu0 %v97
    %153 = vmatpush1.msra.mxu0 %v96
    %154 = vmatprep.subr.mxu0 %v95
    %155 = vmatpush1.msra.mxu0 %v94
    %156 = vmatprep.subr.mxu0 %v93
    %157 = vmatpush1.msra.mxu0 %v92
    %158 = vmatprep.subr.mxu0 0.0
    %159 = vmatpush2.msra.mxu0 0.0
    %160 = vmatprep.subr.mxu0 0.0
    %161 = vmatpush2.msra.mxu0 0.0
    %162 = vmatprep.subr.mxu0 0.0
    %163 = vmatpush2.msra.mxu0 0.0
    %164 = vmatprep.subr.mxu0 0.0
    %165 = vmatpush2.msra.mxu0 0.0
    %166 = vmatprep.subr.mxu0 0.0
    %167 = vmatpush2.msra.mxu0 0.0
    %168 = vmatprep.subr.mxu0 0.0
    %169 = vmatpush2.msra.mxu0 0.0
    %170 = vmatprep.subr.mxu0 0.0
    %171 = vmatpush2.msra.mxu0 0.0
    %172 = vmatprep.subr.mxu0 0.0
    %173 = vmatpush2.msra.mxu0 0.0
    %174 = vmatprep.subr.mxu0 0.0
    %175 = vmatpush2.msra.mxu0 0.0
    %176 = vmatprep.subr.mxu0 0.0
    %177 = vmatpush2.msra.mxu0 0.0
    %178 = vmatprep.subr.mxu0 0.0
    %179 = vmatpush2.msra.mxu0 0.0
    %180 = vmatprep.subr.mxu0 0.0
    %181 = vmatpush2.msra.mxu0 0.0
    %182 = vmatprep.subr.mxu0 0.0
    %183 = vmatpush2.msra.mxu0 0.0
    %184 = vmatprep.subr.mxu0 0.0
    %185 = vmatpush2.msra.mxu0 0.0
    %186 = vmatprep.subr.mxu0 0.0
    %187 = vmatpush2.msra.mxu0 0.0
    %188 = vmatprep.subr.mxu0 0.0
    %189 = vmatpush2.msra.mxu0 0.0
    %190 = vmatprep.mubr.f32.mxu0 0.0
    %191 = vmatmul.mubr.f32.gmra.mxu0 %v124
    %v192 = vpop.f32.mrf.mxu0
    %v193 = vadd.f32 0.0, %v192
    %v194 = vpop.f32.mrf.mxu0
    %v195 = vadd.f32 0.0, %v194
    %196 = vmatprep.mubr.f32.mxu0 0.0
    %197 = vmatmul.mubr.f32.gmra.mxu0 %v125
    %v198 = vpop.f32.mrf.mxu0
    %v199 = vadd.f32 0.0, %v198
    %v200 = vpop.f32.mrf.mxu0
    %v201 = vadd.f32 0.0, %v200
    %202 = vdwg.mxu0
    %203 = vst [vmem:[#allocation2] sm:$0xff] %v193
    %204 = vst [vmem:[#allocation2 + $0x10] sm:$0xff] %v199
    %s205 = scalar_lea.vmem [#allocation2], 32
    %206 = vst [vmem:[%s205] sm:$0xff] %v195
    %207 = vst [vmem:[%s205 + $0x10] sm:$0xff] %v201
    %v208 = vld [vmem:[#allocation3 + $0x8] sm:$0xff]
    %v209 = vld [vmem:[#allocation3 + $0x18] sm:$0xff]
    %210 = vmatprep.subr.mxu0 %v123
    %211 = vmatpush1.msra.mxu0 %v122
    %212 = vmatprep.subr.mxu0 %v121
    %213 = vmatpush1.msra.mxu0 %v120
    %214 = vmatprep.subr.mxu0 %v119
    %215 = vmatpush1.msra.mxu0 %v118
    %216 = vmatprep.subr.mxu0 %v117
    %217 = vmatpush1.msra.mxu0 %v116
    %218 = vmatprep.subr.mxu0 %v115
    %219 = vmatpush1.msra.mxu0 %v114
    %220 = vmatprep.subr.mxu0 %v113
    %221 = vmatpush1.msra.mxu0 %v112
    %222 = vmatprep.subr.mxu0 %v111
    %223 = vmatpush1.msra.mxu0 %v110
    %224 = vmatprep.subr.mxu0 %v109
    %225 = vmatpush1.msra.mxu0 %v108
    %226 = vmatprep.subr.mxu0 %v107
    %227 = vmatpush1.msra.mxu0 %v106
    %228 = vmatprep.subr.mxu0 %v105
    %229 = vmatpush1.msra.mxu0 %v104
    %230 = vmatprep.subr.mxu0 %v103
    %231 = vmatpush1.msra.mxu0 %v102
    %232 = vmatprep.subr.mxu0 %v101
    %233 = vmatpush1.msra.mxu0 %v100
    %234 = vmatprep.subr.mxu0 %v99
    %235 = vmatpush1.msra.mxu0 %v98
    %236 = vmatprep.subr.mxu0 %v97
    %237 = vmatpush1.msra.mxu0 %v96
    %238 = vmatprep.subr.mxu0 %v95
    %239 = vmatpush1.msra.mxu0 %v94
    %240 = vmatprep.subr.mxu0 %v93
    %241 = vmatpush1.msra.mxu0 %v92
    %242 = vmatprep.subr.mxu0 0.0
    %243 = vmatpush2.msra.mxu0 0.0
    %244 = vmatprep.subr.mxu0 0.0
    %245 = vmatpush2.msra.mxu0 0.0
    %246 = vmatprep.subr.mxu0 0.0
    %247 = vmatpush2.msra.mxu0 0.0
    %248 = vmatprep.subr.mxu0 0.0
    %249 = vmatpush2.msra.mxu0 0.0
    %250 = vmatprep.subr.mxu0 0.0
    %251 = vmatpush2.msra.mxu0 0.0
    %252 = vmatprep.subr.mxu0 0.0
    %253 = vmatpush2.msra.mxu0 0.0
    %254 = vmatprep.subr.mxu0 0.0
    %255 = vmatpush2.msra.mxu0 0.0
    %256 = vmatprep.subr.mxu0 0.0
    %257 = vmatpush2.msra.mxu0 0.0
    %258 = vmatprep.subr.mxu0 0.0
    %259 = vmatpush2.msra.mxu0 0.0
    %260 = vmatprep.subr.mxu0 0.0
    %261 = vmatpush2.msra.mxu0 0.0
    %262 = vmatprep.subr.mxu0 0.0
    %263 = vmatpush2.msra.mxu0 0.0
    %264 = vmatprep.subr.mxu0 0.0
    %265 = vmatpush2.msra.mxu0 0.0
    %266 = vmatprep.subr.mxu0 0.0
    %267 = vmatpush2.msra.mxu0 0.0
    %268 = vmatprep.subr.mxu0 0.0
    %269 = vmatpush2.msra.mxu0 0.0
    %270 = vmatprep.subr.mxu0 0.0
    %271 = vmatpush2.msra.mxu0 0.0
    %272 = vmatprep.subr.mxu0 0.0
    %273 = vmatpush2.msra.mxu0 0.0
    %274 = vmatprep.mubr.f32.mxu0 0.0
    %275 = vmatmul.mubr.f32.gmra.mxu0 %v208
    %v276 = vpop.f32.mrf.mxu0
    %v277 = vadd.f32 0.0, %v276
    %v278 = vpop.f32.mrf.mxu0
    %v279 = vadd.f32 0.0, %v278
    %280 = vmatprep.mubr.f32.mxu0 0.0
    %281 = vmatmul.mubr.f32.gmra.mxu0 %v209
    %v282 = vpop.f32.mrf.mxu0
    %v283 = vadd.f32 0.0, %v282
    %v284 = vpop.f32.mrf.mxu0
    %v285 = vadd.f32 0.0, %v284
    %286 = vdwg.mxu0
    %287 = vst [vmem:[#allocation2 + $0x8] sm:$0xff] %v277
    %288 = vst [vmem:[#allocation2 + $0x18] sm:$0xff] %v283
    %289 = vst [vmem:[%s205 + $0x8] sm:$0xff] %v279
    %290 = vst [vmem:[%s205 + $0x18] sm:$0xff] %v285
    %v291 = vld [vmem:[#allocation8] sm:$0xff]
    %v292 = vld [vmem:[#allocation8 + $0x8] sm:$0xff]
    %s293 = scalar_lea.vmem [#allocation8], 16
    %v294 = vld [vmem:[%s293] sm:$0xff]
    %v295 = vld [vmem:[%s293 + $0x8] sm:$0xff]
    %s296 = scalar_lea.vmem [#allocation8], 32
    %v297 = vld [vmem:[%s296] sm:$0xff]
    %v298 = vld [vmem:[%s296 + $0x8] sm:$0xff]
    %s299 = scalar_lea.vmem [#allocation8], 48
    %v300 = vld [vmem:[%s299] sm:$0xff]
    %v301 = vld [vmem:[%s299 + $0x8] sm:$0xff]
    %v302 = vld [vmem:[#allocation2] sm:$0xff]
    %v303 = vld [vmem:[#allocation2 + $0x8] sm:$0xff]
    %v304 = vld [vmem:[#allocation2 + $0x10] sm:$0xff]
    %v305 = vld [vmem:[#allocation2 + $0x18] sm:$0xff]
    %v306 = vld [vmem:[%s205] sm:$0xff]
    %v307 = vld [vmem:[%s205 + $0x8] sm:$0xff]
    %v308 = vld [vmem:[%s205 + $0x10] sm:$0xff]
    %v309 = vld [vmem:[%s205 + $0x18] sm:$0xff]
    %vm310 = vcmask 130048
    %v312 = vsel %vm310, %v291, 0
    %v315 = vsel %vm310, %v292, 0
    %317 = vmatprep.subr.mxu0 0.0
    %318 = vmatpush1.msra.mxu0 0.0
    %319 = vmatprep.subr.mxu0 0.0
    %320 = vmatpush1.msra.mxu0 0.0
    %321 = vmatprep.subr.mxu0 0.0
    %322 = vmatpush1.msra.mxu0 0.0
    %323 = vmatprep.subr.mxu0 0.0
    %324 = vmatpush1.msra.mxu0 0.0
    %325 = vmatprep.subr.mxu0 0.0
    %326 = vmatpush1.msra.mxu0 0.0
    %327 = vmatprep.subr.mxu0 0.0
    %328 = vmatpush1.msra.mxu0 0.0
    %329 = vmatprep.subr.mxu0 0.0
    %330 = vmatpush1.msra.mxu0 0.0
    %331 = vmatprep.subr.mxu0 0.0
    %332 = vmatpush1.msra.mxu0 0.0
    %333 = vmatprep.subr.mxu0 0.0
    %334 = vmatpush1.msra.mxu0 0.0
    %335 = vmatprep.subr.mxu0 0.0
    %336 = vmatpush1.msra.mxu0 0.0
    %337 = vmatprep.subr.mxu0 0.0
    %338 = vmatpush1.msra.mxu0 0.0
    %339 = vmatprep.subr.mxu0 0.0
    %340 = vmatpush1.msra.mxu0 0.0
    %341 = vmatprep.subr.mxu0 0.0
    %342 = vmatpush1.msra.mxu0 0.0
    %343 = vmatprep.subr.mxu0 0.0
    %344 = vmatpush1.msra.mxu0 0.0
    %345 = vmatprep.subr.mxu0 %v305
    %346 = vmatpush1.msra.mxu0 %v304
    %347 = vmatprep.subr.mxu0 %v303
    %348 = vmatpush1.msra.mxu0 %v302
    %349 = vmatprep.subr.mxu0 0.0
    %350 = vmatpush2.msra.mxu0 0.0
    %351 = vmatprep.subr.mxu0 0.0
    %352 = vmatpush2.msra.mxu0 0.0
    %353 = vmatprep.subr.mxu0 0.0
    %354 = vmatpush2.msra.mxu0 0.0
    %355 = vmatprep.subr.mxu0 0.0
    %356 = vmatpush2.msra.mxu0 0.0
    %357 = vmatprep.subr.mxu0 0.0
    %358 = vmatpush2.msra.mxu0 0.0
    %359 = vmatprep.subr.mxu0 0.0
    %360 = vmatpush2.msra.mxu0 0.0
    %361 = vmatprep.subr.mxu0 0.0
    %362 = vmatpush2.msra.mxu0 0.0
    %363 = vmatprep.subr.mxu0 0.0
    %364 = vmatpush2.msra.mxu0 0.0
    %365 = vmatprep.subr.mxu0 0.0
    %366 = vmatpush2.msra.mxu0 0.0
    %367 = vmatprep.subr.mxu0 0.0
    %368 = vmatpush2.msra.mxu0 0.0
    %369 = vmatprep.subr.mxu0 0.0
    %370 = vmatpush2.msra.mxu0 0.0
    %371 = vmatprep.subr.mxu0 0.0
    %372 = vmatpush2.msra.mxu0 0.0
    %373 = vmatprep.subr.mxu0 0.0
    %374 = vmatpush2.msra.mxu0 0.0
    %375 = vmatprep.subr.mxu0 0.0
    %376 = vmatpush2.msra.mxu0 0.0
    %377 = vmatprep.subr.mxu0 0.0
    %378 = vmatpush2.msra.mxu0 0.0
    %379 = vmatprep.subr.mxu0 0.0
    %380 = vmatpush2.msra.mxu0 0.0
    %381 = vmatprep.mubr.f32.mxu0 0.0
    %382 = vmatmul.mubr.f32.gmra.mxu0 %v312
    %v383 = vpop.f32.mrf.mxu0
    %v384 = vadd.f32 0.0, %v383
    %v385 = vpop.f32.mrf.mxu0
    %v386 = vadd.f32 0.0, %v385
    %387 = vmatprep.mubr.f32.mxu0 0.0
    %388 = vmatmul.mubr.f32.gmra.mxu0 %v315
    %v389 = vpop.f32.mrf.mxu0
    %v390 = vadd.f32 0.0, %v389
    %v391 = vpop.f32.mrf.mxu0
    %v392 = vadd.f32 0.0, %v391
    %393 = vdwg.mxu0
    %v395 = vsel %vm310, %v294, 0
    %v398 = vsel %vm310, %v295, 0
    %400 = vmatprep.subr.mxu0 0.0
    %401 = vmatpush1.msra.mxu0 0.0
    %402 = vmatprep.subr.mxu0 0.0
    %403 = vmatpush1.msra.mxu0 0.0
    %404 = vmatprep.subr.mxu0 0.0
    %405 = vmatpush1.msra.mxu0 0.0
    %406 = vmatprep.subr.mxu0 0.0
    %407 = vmatpush1.msra.mxu0 0.0
    %408 = vmatprep.subr.mxu0 0.0
    %409 = vmatpush1.msra.mxu0 0.0
    %410 = vmatprep.subr.mxu0 0.0
    %411 = vmatpush1.msra.mxu0 0.0
    %412 = vmatprep.subr.mxu0 0.0
    %413 = vmatpush1.msra.mxu0 0.0
    %414 = vmatprep.subr.mxu0 0.0
    %415 = vmatpush1.msra.mxu0 0.0
    %416 = vmatprep.subr.mxu0 0.0
    %417 = vmatpush1.msra.mxu0 0.0
    %418 = vmatprep.subr.mxu0 0.0
    %419 = vmatpush1.msra.mxu0 0.0
    %420 = vmatprep.subr.mxu0 0.0
    %421 = vmatpush1.msra.mxu0 0.0
    %422 = vmatprep.subr.mxu0 0.0
    %423 = vmatpush1.msra.mxu0 0.0
    %424 = vmatprep.subr.mxu0 0.0
    %425 = vmatpush1.msra.mxu0 0.0
    %426 = vmatprep.subr.mxu0 0.0
    %427 = vmatpush1.msra.mxu0 0.0
    %428 = vmatprep.subr.mxu0 %v309
    %429 = vmatpush1.msra.mxu0 %v308
    %430 = vmatprep.subr.mxu0 %v307
    %431 = vmatpush1.msra.mxu0 %v306
    %432 = vmatprep.subr.mxu0 0.0
    %433 = vmatpush2.msra.mxu0 0.0
    %434 = vmatprep.subr.mxu0 0.0
    %435 = vmatpush2.msra.mxu0 0.0
    %436 = vmatprep.subr.mxu0 0.0
    %437 = vmatpush2.msra.mxu0 0.0
    %438 = vmatprep.subr.mxu0 0.0
    %439 = vmatpush2.msra.mxu0 0.0
    %440 = vmatprep.subr.mxu0 0.0
    %441 = vmatpush2.msra.mxu0 0.0
    %442 = vmatprep.subr.mxu0 0.0
    %443 = vmatpush2.msra.mxu0 0.0
    %444 = vmatprep.subr.mxu0 0.0
    %445 = vmatpush2.msra.mxu0 0.0
    %446 = vmatprep.subr.mxu0 0.0
    %447 = vmatpush2.msra.mxu0 0.0
    %448 = vmatprep.subr.mxu0 0.0
    %449 = vmatpush2.msra.mxu0 0.0
    %450 = vmatprep.subr.mxu0 0.0
    %451 = vmatpush2.msra.mxu0 0.0
    %452 = vmatprep.subr.mxu0 0.0
    %453 = vmatpush2.msra.mxu0 0.0
    %454 = vmatprep.subr.mxu0 0.0
    %455 = vmatpush2.msra.mxu0 0.0
    %456 = vmatprep.subr.mxu0 0.0
    %457 = vmatpush2.msra.mxu0 0.0
    %458 = vmatprep.subr.mxu0 0.0
    %459 = vmatpush2.msra.mxu0 0.0
    %460 = vmatprep.subr.mxu0 0.0
    %461 = vmatpush2.msra.mxu0 0.0
    %462 = vmatprep.subr.mxu0 0.0
    %463 = vmatpush2.msra.mxu0 0.0
    %464 = vmatprep.mubr.f32.mxu0 0.0
    %465 = vmatmul.mubr.f32.gmra.mxu0 %v395
    %v466 = vpop.f32.mrf.mxu0
    %v467 = vadd.f32 0.0, %v466
    %v468 = vpop.f32.mrf.mxu0
    %v469 = vadd.f32 0.0, %v468
    %470 = vmatprep.mubr.f32.mxu0 0.0
    %471 = vmatmul.mubr.f32.gmra.mxu0 %v398
    %v472 = vpop.f32.mrf.mxu0
    %v473 = vadd.f32 0.0, %v472
    %v474 = vpop.f32.mrf.mxu0
    %v475 = vadd.f32 0.0, %v474
    %476 = vdwg.mxu0
    %v477 = vadd.f32 %v302, %v306
    %v478 = vadd.f32 %v303, %v307
    %v479 = vadd.f32 %v304, %v308
    %v480 = vadd.f32 %v305, %v309
    %v482 = vsel %vm310, %v297, 0
    %v485 = vsel %vm310, %v298, 0
    %487 = vmatprep.subr.mxu0 0.0
    %488 = vmatpush1.msra.mxu0 0.0
    %489 = vmatprep.subr.mxu0 0.0
    %490 = vmatpush1.msra.mxu0 0.0
    %491 = vmatprep.subr.mxu0 0.0
    %492 = vmatpush1.msra.mxu0 0.0
    %493 = vmatprep.subr.mxu0 0.0
    %494 = vmatpush1.msra.mxu0 0.0
    %495 = vmatprep.subr.mxu0 0.0
    %496 = vmatpush1.msra.mxu0 0.0
    %497 = vmatprep.subr.mxu0 0.0
    %498 = vmatpush1.msra.mxu0 0.0
    %499 = vmatprep.subr.mxu0 0.0
    %500 = vmatpush1.msra.mxu0 0.0
    %501 = vmatprep.subr.mxu0 0.0
    %502 = vmatpush1.msra.mxu0 0.0
    %503 = vmatprep.subr.mxu0 0.0
    %504 = vmatpush1.msra.mxu0 0.0
    %505 = vmatprep.subr.mxu0 0.0
    %506 = vmatpush1.msra.mxu0 0.0
    %507 = vmatprep.subr.mxu0 0.0
    %508 = vmatpush1.msra.mxu0 0.0
    %509 = vmatprep.subr.mxu0 0.0
    %510 = vmatpush1.msra.mxu0 0.0
    %511 = vmatprep.subr.mxu0 0.0
    %512 = vmatpush1.msra.mxu0 0.0
    %513 = vmatprep.subr.mxu0 0.0
    %514 = vmatpush1.msra.mxu0 0.0
    %515 = vmatprep.subr.mxu0 %v480
    %516 = vmatpush1.msra.mxu0 %v479
    %517 = vmatprep.subr.mxu0 %v478
    %518 = vmatpush1.msra.mxu0 %v477
    %519 = vmatprep.subr.mxu0 0.0
    %520 = vmatpush2.msra.mxu0 0.0
    %521 = vmatprep.subr.mxu0 0.0
    %522 = vmatpush2.msra.mxu0 0.0
    %523 = vmatprep.subr.mxu0 0.0
    %524 = vmatpush2.msra.mxu0 0.0
    %525 = vmatprep.subr.mxu0 0.0
    %526 = vmatpush2.msra.mxu0 0.0
    %527 = vmatprep.subr.mxu0 0.0
    %528 = vmatpush2.msra.mxu0 0.0
    %529 = vmatprep.subr.mxu0 0.0
    %530 = vmatpush2.msra.mxu0 0.0
    %531 = vmatprep.subr.mxu0 0.0
    %532 = vmatpush2.msra.mxu0 0.0
    %533 = vmatprep.subr.mxu0 0.0
    %534 = vmatpush2.msra.mxu0 0.0
    %535 = vmatprep.subr.mxu0 0.0
    %536 = vmatpush2.msra.mxu0 0.0
    %537 = vmatprep.subr.mxu0 0.0
    %538 = vmatpush2.msra.mxu0 0.0
    %539 = vmatprep.subr.mxu0 0.0
    %540 = vmatpush2.msra.mxu0 0.0
    %541 = vmatprep.subr.mxu0 0.0
    %542 = vmatpush2.msra.mxu0 0.0
    %543 = vmatprep.subr.mxu0 0.0
    %544 = vmatpush2.msra.mxu0 0.0
    %545 = vmatprep.subr.mxu0 0.0
    %546 = vmatpush2.msra.mxu0 0.0
    %547 = vmatprep.subr.mxu0 0.0
    %548 = vmatpush2.msra.mxu0 0.0
    %549 = vmatprep.subr.mxu0 0.0
    %550 = vmatpush2.msra.mxu0 0.0
    %551 = vmatprep.mubr.f32.mxu0 0.0
    %552 = vmatmul.mubr.f32.gmra.mxu0 %v482
    %v553 = vpop.f32.mrf.mxu0
    %v554 = vadd.f32 0.0, %v553
    %v555 = vpop.f32.mrf.mxu0
    %v556 = vadd.f32 0.0, %v555
    %557 = vmatprep.mubr.f32.mxu0 0.0
    %558 = vmatmul.mubr.f32.gmra.mxu0 %v485
    %v559 = vpop.f32.mrf.mxu0
    %v560 = vadd.f32 0.0, %v559
    %v561 = vpop.f32.mrf.mxu0
    %v562 = vadd.f32 0.0, %v561
    %563 = vdwg.mxu0
    %v564 = vsub.f32 %v384, %v467
    %v565 = vsub.f32 %v386, %v469
    %v566 = vsub.f32 %v390, %v473
    %v567 = vsub.f32 %v392, %v475
    %v568 = vsub.f32 %v554, %v384
    %v569 = vsub.f32 %v556, %v386
    %v570 = vsub.f32 %v560, %v390
    %v571 = vsub.f32 %v562, %v392
    %v572 = vsub.f32 %v568, %v467
    %v573 = vsub.f32 %v569, %v469
    %v574 = vsub.f32 %v570, %v473
    %v575 = vsub.f32 %v571, %v475
    %v576 = vld [vmem:[#allocation6] sm:$0xff]
    %v577 = vld [vmem:[#allocation6 + $0x8] sm:$0xff]
    %v578 = vld [vmem:[#allocation6 + $0x10] sm:$0xff]
    %v579 = vld [vmem:[#allocation6 + $0x18] sm:$0xff]
    %v580 = vld [vmem:[%s1] sm:$0xff]
    %v581 = vld [vmem:[%s1 + $0x8] sm:$0xff]
    %v582 = vld [vmem:[%s1 + $0x10] sm:$0xff]
    %v583 = vld [vmem:[%s1 + $0x18] sm:$0xff]
    %v584 = vmul.f32 %v576, %v564
    %v585 = vmul.f32 %v577, %v565
    %v586 = vmul.f32 %v578, %v566
    %v587 = vmul.f32 %v579, %v567
    %v588 = vadd.f32 %v580, %v584
    %v589 = vadd.f32 %v581, %v585
    %v590 = vadd.f32 %v582, %v586
    %v591 = vadd.f32 %v583, %v587
    %s592 = scalar_lea.vmem %s1, 32
    %v593 = vld [vmem:[%s592] sm:$0xff]
    %v594 = vld [vmem:[%s592 + $0x8] sm:$0xff]
    %v595 = vld [vmem:[%s592 + $0x10] sm:$0xff]
    %v596 = vld [vmem:[%s592 + $0x18] sm:$0xff]
    %v597 = vmul.f32 %v576, %v572
    %v598 = vmul.f32 %v577, %v573
    %v599 = vmul.f32 %v578, %v574
    %v600 = vmul.f32 %v579, %v575
    %v601 = vadd.f32 %v593, %v597
    %v602 = vadd.f32 %v594, %v598
    %v603 = vadd.f32 %v595, %v599
    %v604 = vadd.f32 %v596, %v600
    %605 = vmatprep.subr.mxu0 0.0
    %606 = vmatpush1.msra.mxu0 0.0
    %607 = vmatprep.subr.mxu0 0.0
    %608 = vmatpush1.msra.mxu0 0.0
    %609 = vmatprep.subr.mxu0 0.0
    %610 = vmatpush1.msra.mxu0 0.0
    %611 = vmatprep.subr.mxu0 0.0
    %612 = vmatpush1.msra.mxu0 0.0
    %613 = vmatprep.subr.mxu0 0.0
    %614 = vmatpush1.msra.mxu0 0.0
    %615 = vmatprep.subr.mxu0 0.0
    %616 = vmatpush1.msra.mxu0 0.0
    %617 = vmatprep.subr.mxu0 0.0
    %618 = vmatpush1.msra.mxu0 0.0
    %619 = vmatprep.subr.mxu0 0.0
    %620 = vmatpush1.msra.mxu0 0.0
    %621 = vmatprep.subr.mxu0 0.0
    %622 = vmatpush1.msra.mxu0 0.0
    %623 = vmatprep.subr.mxu0 0.0
    %624 = vmatpush1.msra.mxu0 0.0
    %625 = vmatprep.subr.mxu0 0.0
    %626 = vmatpush1.msra.mxu0 0.0
    %627 = vmatprep.subr.mxu0 0.0
    %628 = vmatpush1.msra.mxu0 0.0
    %629 = vmatprep.subr.mxu0 0.0
    %630 = vmatpush1.msra.mxu0 0.0
    %631 = vmatprep.subr.mxu0 0.0
    %632 = vmatpush1.msra.mxu0 0.0
    %633 = vmatprep.subr.mxu0 %v591
    %634 = vmatpush1.msra.mxu0 %v590
    %635 = vmatprep.subr.mxu0 %v589
    %636 = vmatpush1.msra.mxu0 %v588
    %637 = vmatprep.subr.mxu0 0.0
    %638 = vmatpush2.msra.mxu0 0.0
    %639 = vmatprep.subr.mxu0 0.0
    %640 = vmatpush2.msra.mxu0 0.0
    %641 = vmatprep.subr.mxu0 0.0
    %642 = vmatpush2.msra.mxu0 0.0
    %643 = vmatprep.subr.mxu0 0.0
    %644 = vmatpush2.msra.mxu0 0.0
    %645 = vmatprep.subr.mxu0 0.0
    %646 = vmatpush2.msra.mxu0 0.0
    %647 = vmatprep.subr.mxu0 0.0
    %648 = vmatpush2.msra.mxu0 0.0
    %649 = vmatprep.subr.mxu0 0.0
    %650 = vmatpush2.msra.mxu0 0.0
    %651 = vmatprep.subr.mxu0 0.0
    %652 = vmatpush2.msra.mxu0 0.0
    %653 = vmatprep.subr.mxu0 0.0
    %654 = vmatpush2.msra.mxu0 0.0
    %655 = vmatprep.subr.mxu0 0.0
    %656 = vmatpush2.msra.mxu0 0.0
    %657 = vmatprep.subr.mxu0 0.0
    %658 = vmatpush2.msra.mxu0 0.0
    %659 = vmatprep.subr.mxu0 0.0
    %660 = vmatpush2.msra.mxu0 0.0
    %661 = vmatprep.subr.mxu0 0.0
    %662 = vmatpush2.msra.mxu0 0.0
    %663 = vmatprep.subr.mxu0 0.0
    %664 = vmatpush2.msra.mxu0 0.0
    %665 = vmatprep.subr.mxu0 0.0
    %666 = vmatpush2.msra.mxu0 0.0
    %667 = vmatprep.subr.mxu0 0.0
    %668 = vmatpush2.msra.mxu0 0.0
    %669 = vmatprep.mubr.f32.mxu0 0.0
    %670 = vmatmul.mubr.f32.gmra.mxu0 %v312
    %v671 = vpop.f32.mrf.mxu0
    %v672 = vadd.f32 0.0, %v671
    %v673 = vpop.f32.mrf.mxu0
    %v674 = vadd.f32 0.0, %v673
    %675 = vmatprep.mubr.f32.mxu0 0.0
    %676 = vmatmul.mubr.f32.gmra.mxu0 %v315
    %v677 = vpop.f32.mrf.mxu0
    %v678 = vadd.f32 0.0, %v677
    %v679 = vpop.f32.mrf.mxu0
    %v680 = vadd.f32 0.0, %v679
    %681 = vdwg.mxu0
    %682 = vmatprep.subr.mxu0 0.0
    %683 = vmatpush1.msra.mxu0 0.0
    %684 = vmatprep.subr.mxu0 0.0
    %685 = vmatpush1.msra.mxu0 0.0
    %686 = vmatprep.subr.mxu0 0.0
    %687 = vmatpush1.msra.mxu0 0.0
    %688 = vmatprep.subr.mxu0 0.0
    %689 = vmatpush1.msra.mxu0 0.0
    %690 = vmatprep.subr.mxu0 0.0
    %691 = vmatpush1.msra.mxu0 0.0
    %692 = vmatprep.subr.mxu0 0.0
    %693 = vmatpush1.msra.mxu0 0.0
    %694 = vmatprep.subr.mxu0 0.0
    %695 = vmatpush1.msra.mxu0 0.0
    %696 = vmatprep.subr.mxu0 0.0
    %697 = vmatpush1.msra.mxu0 0.0
    %698 = vmatprep.subr.mxu0 0.0
    %699 = vmatpush1.msra.mxu0 0.0
    %700 = vmatprep.subr.mxu0 0.0
    %701 = vmatpush1.msra.mxu0 0.0
    %702 = vmatprep.subr.mxu0 0.0
    %703 = vmatpush1.msra.mxu0 0.0
    %704 = vmatprep.subr.mxu0 0.0
    %705 = vmatpush1.msra.mxu0 0.0
    %706 = vmatprep.subr.mxu0 0.0
    %707 = vmatpush1.msra.mxu0 0.0
    %708 = vmatprep.subr.mxu0 0.0
    %709 = vmatpush1.msra.mxu0 0.0
    %710 = vmatprep.subr.mxu0 %v604
    %711 = vmatpush1.msra.mxu0 %v603
    %712 = vmatprep.subr.mxu0 %v602
    %713 = vmatpush1.msra.mxu0 %v601
    %714 = vmatprep.subr.mxu0 0.0
    %715 = vmatpush2.msra.mxu0 0.0
    %716 = vmatprep.subr.mxu0 0.0
    %717 = vmatpush2.msra.mxu0 0.0
    %718 = vmatprep.subr.mxu0 0.0
    %719 = vmatpush2.msra.mxu0 0.0
    %720 = vmatprep.subr.mxu0 0.0
    %721 = vmatpush2.msra.mxu0 0.0
    %722 = vmatprep.subr.mxu0 0.0
    %723 = vmatpush2.msra.mxu0 0.0
    %724 = vmatprep.subr.mxu0 0.0
    %725 = vmatpush2.msra.mxu0 0.0
    %726 = vmatprep.subr.mxu0 0.0
    %727 = vmatpush2.msra.mxu0 0.0
    %728 = vmatprep.subr.mxu0 0.0
    %729 = vmatpush2.msra.mxu0 0.0
    %730 = vmatprep.subr.mxu0 0.0
    %731 = vmatpush2.msra.mxu0 0.0
    %732 = vmatprep.subr.mxu0 0.0
    %733 = vmatpush2.msra.mxu0 0.0
    %734 = vmatprep.subr.mxu0 0.0
    %735 = vmatpush2.msra.mxu0 0.0
    %736 = vmatprep.subr.mxu0 0.0
    %737 = vmatpush2.msra.mxu0 0.0
    %738 = vmatprep.subr.mxu0 0.0
    %739 = vmatpush2.msra.mxu0 0.0
    %740 = vmatprep.subr.mxu0 0.0
    %741 = vmatpush2.msra.mxu0 0.0
    %742 = vmatprep.subr.mxu0 0.0
    %743 = vmatpush2.msra.mxu0 0.0
    %744 = vmatprep.subr.mxu0 0.0
    %745 = vmatpush2.msra.mxu0 0.0
    %746 = vmatprep.mubr.f32.mxu0 0.0
    %747 = vmatmul.mubr.f32.gmra.mxu0 %v395
    %v748 = vpop.f32.mrf.mxu0
    %v749 = vadd.f32 0.0, %v748
    %v750 = vpop.f32.mrf.mxu0
    %v751 = vadd.f32 0.0, %v750
    %752 = vmatprep.mubr.f32.mxu0 0.0
    %753 = vmatmul.mubr.f32.gmra.mxu0 %v398
    %v754 = vpop.f32.mrf.mxu0
    %v755 = vadd.f32 0.0, %v754
    %v756 = vpop.f32.mrf.mxu0
    %v757 = vadd.f32 0.0, %v756
    %758 = vdwg.mxu0
    %v759 = vadd.f32 %v588, %v601
    %v760 = vadd.f32 %v589, %v602
    %v761 = vadd.f32 %v590, %v603
    %v762 = vadd.f32 %v591, %v604
    %v764 = vsel %vm310, %v300, 0
    %v767 = vsel %vm310, %v301, 0
    %769 = vmatprep.subr.mxu0 0.0
    %770 = vmatpush1.msra.mxu0 0.0
    %771 = vmatprep.subr.mxu0 0.0
    %772 = vmatpush1.msra.mxu0 0.0
    %773 = vmatprep.subr.mxu0 0.0
    %774 = vmatpush1.msra.mxu0 0.0
    %775 = vmatprep.subr.mxu0 0.0
    %776 = vmatpush1.msra.mxu0 0.0
    %777 = vmatprep.subr.mxu0 0.0
    %778 = vmatpush1.msra.mxu0 0.0
    %779 = vmatprep.subr.mxu0 0.0
    %780 = vmatpush1.msra.mxu0 0.0
    %781 = vmatprep.subr.mxu0 0.0
    %782 = vmatpush1.msra.mxu0 0.0
    %783 = vmatprep.subr.mxu0 0.0
    %784 = vmatpush1.msra.mxu0 0.0
    %785 = vmatprep.subr.mxu0 0.0
    %786 = vmatpush1.msra.mxu0 0.0
    %787 = vmatprep.subr.mxu0 0.0
    %788 = vmatpush1.msra.mxu0 0.0
    %789 = vmatprep.subr.mxu0 0.0
    %790 = vmatpush1.msra.mxu0 0.0
    %791 = vmatprep.subr.mxu0 0.0
    %792 = vmatpush1.msra.mxu0 0.0
    %793 = vmatprep.subr.mxu0 0.0
    %794 = vmatpush1.msra.mxu0 0.0
    %795 = vmatprep.subr.mxu0 0.0
    %796 = vmatpush1.msra.mxu0 0.0
    %797 = vmatprep.subr.mxu0 %v762
    %798 = vmatpush1.msra.mxu0 %v761
    %799 = vmatprep.subr.mxu0 %v760
    %800 = vmatpush1.msra.mxu0 %v759
    %801 = vmatprep.subr.mxu0 0.0
    %802 = vmatpush2.msra.mxu0 0.0
    %803 = vmatprep.subr.mxu0 0.0
    %804 = vmatpush2.msra.mxu0 0.0
    %805 = vmatprep.subr.mxu0 0.0
    %806 = vmatpush2.msra.mxu0 0.0
    %807 = vmatprep.subr.mxu0 0.0
    %808 = vmatpush2.msra.mxu0 0.0
    %809 = vmatprep.subr.mxu0 0.0
    %810 = vmatpush2.msra.mxu0 0.0
    %811 = vmatprep.subr.mxu0 0.0
    %812 = vmatpush2.msra.mxu0 0.0
    %813 = vmatprep.subr.mxu0 0.0
    %814 = vmatpush2.msra.mxu0 0.0
    %815 = vmatprep.subr.mxu0 0.0
    %816 = vmatpush2.msra.mxu0 0.0
    %817 = vmatprep.subr.mxu0 0.0
    %818 = vmatpush2.msra.mxu0 0.0
    %819 = vmatprep.subr.mxu0 0.0
    %820 = vmatpush2.msra.mxu0 0.0
    %821 = vmatprep.subr.mxu0 0.0
    %822 = vmatpush2.msra.mxu0 0.0
    %823 = vmatprep.subr.mxu0 0.0
    %824 = vmatpush2.msra.mxu0 0.0
    %825 = vmatprep.subr.mxu0 0.0
    %826 = vmatpush2.msra.mxu0 0.0
    %827 = vmatprep.subr.mxu0 0.0
    %828 = vmatpush2.msra.mxu0 0.0
    %829 = vmatprep.subr.mxu0 0.0
    %830 = vmatpush2.msra.mxu0 0.0
    %831 = vmatprep.subr.mxu0 0.0
    %832 = vmatpush2.msra.mxu0 0.0
    %833 = vmatprep.mubr.f32.mxu0 0.0
    %834 = vmatmul.mubr.f32.gmra.mxu0 %v764
    %v835 = vpop.f32.mrf.mxu0
    %v836 = vadd.f32 0.0, %v835
    %v837 = vpop.f32.mrf.mxu0
    %v838 = vadd.f32 0.0, %v837
    %839 = vmatprep.mubr.f32.mxu0 0.0
    %840 = vmatmul.mubr.f32.gmra.mxu0 %v767
    %v841 = vpop.f32.mrf.mxu0
    %v842 = vadd.f32 0.0, %v841
    %v843 = vpop.f32.mrf.mxu0
    %v844 = vadd.f32 0.0, %v843
    %845 = vdwg.mxu0
    %v846 = vadd.f32 %v672, %v749
    %v847 = vadd.f32 %v674, %v751
    %v848 = vadd.f32 %v678, %v755
    %v849 = vadd.f32 %v680, %v757
    %v850 = vsub.f32 %v836, %v672
    %v851 = vsub.f32 %v838, %v674
    %v852 = vsub.f32 %v842, %v678
    %v853 = vsub.f32 %v844, %v680
    %v854 = vadd.f32 %v850, %v749
    %v855 = vadd.f32 %v851, %v751
    %v856 = vadd.f32 %v852, %v755
    %v857 = vadd.f32 %v853, %v757
    %v858 = vld [vmem:[#allocation11] sm:$0xff]
    %v859 = vld [vmem:[#allocation11 + $0x8] sm:$0xff]
    %v860 = vld [vmem:[#allocation11 + $0x10] sm:$0xff]
    %v861 = vld [vmem:[#allocation11 + $0x18] sm:$0xff]
    %v862 = vld [vmem:[#allocation11 + $0x20] sm:$0xff]
    %v863 = vld [vmem:[#allocation11 + $0x28] sm:$0xff]
    %v864 = vld [vmem:[#allocation11 + $0x30] sm:$0xff]
    %v865 = vld [vmem:[#allocation11 + $0x38] sm:$0xff]
    %v866 = vld [vmem:[#allocation11 + $0x40] sm:$0xff]
    %v867 = vld [vmem:[#allocation11 + $0x48] sm:$0xff]
    %v868 = vld [vmem:[#allocation11 + $0x50] sm:$0xff]
    %v869 = vld [vmem:[#allocation11 + $0x58] sm:$0xff]
    %v870 = vld [vmem:[#allocation11 + $0x60] sm:$0xff]
    %v871 = vld [vmem:[#allocation11 + $0x68] sm:$0xff]
    %v872 = vld [vmem:[#allocation11 + $0x70] sm:$0xff]
    %v873 = vld [vmem:[#allocation11 + $0x78] sm:$0xff]
    %s874 = scalar_lea.vmem [#allocation11], 128
    %v875 = vld [vmem:[%s874] sm:$0xff]
    %v876 = vld [vmem:[%s874 + $0x8] sm:$0xff]
    %v877 = vld [vmem:[%s874 + $0x10] sm:$0xff]
    %v878 = vld [vmem:[%s874 + $0x18] sm:$0xff]
    %v879 = vld [vmem:[%s874 + $0x20] sm:$0xff]
    %v880 = vld [vmem:[%s874 + $0x28] sm:$0xff]
    %v881 = vld [vmem:[%s874 + $0x30] sm:$0xff]
    %v882 = vld [vmem:[%s874 + $0x38] sm:$0xff]
    %v883 = vld [vmem:[%s874 + $0x40] sm:$0xff]
    %v884 = vld [vmem:[%s874 + $0x48] sm:$0xff]
    %v885 = vld [vmem:[%s874 + $0x50] sm:$0xff]
    %v886 = vld [vmem:[%s874 + $0x58] sm:$0xff]
    %v887 = vld [vmem:[%s874 + $0x60] sm:$0xff]
    %v888 = vld [vmem:[%s874 + $0x68] sm:$0xff]
    %v889 = vld [vmem:[%s874 + $0x70] sm:$0xff]
    %v890 = vld [vmem:[%s874 + $0x78] sm:$0xff]
    %891 = vmatprep.subr.mxu0 0.0
    %892 = vmatpush1.msra.mxu0 %v890
    %893 = vmatprep.subr.mxu0 0.0
    %894 = vmatpush1.msra.mxu0 %v889
    %895 = vmatprep.subr.mxu0 0.0
    %896 = vmatpush1.msra.mxu0 %v888
    %897 = vmatprep.subr.mxu0 0.0
    %898 = vmatpush1.msra.mxu0 %v887
    %899 = vmatprep.subr.mxu0 0.0
    %900 = vmatpush1.msra.mxu0 %v886
    %901 = vmatprep.subr.mxu0 0.0
    %902 = vmatpush1.msra.mxu0 %v885
    %903 = vmatprep.subr.mxu0 0.0
    %904 = vmatpush1.msra.mxu0 %v884
    %905 = vmatprep.subr.mxu0 0.0
    %906 = vmatpush1.msra.mxu0 %v883
    %907 = vmatprep.subr.mxu0 0.0
    %908 = vmatpush1.msra.mxu0 %v882
    %909 = vmatprep.subr.mxu0 0.0
    %910 = vmatpush1.msra.mxu0 %v881
    %911 = vmatprep.subr.mxu0 0.0
    %912 = vmatpush1.msra.mxu0 %v880
    %913 = vmatprep.subr.mxu0 0.0
    %914 = vmatpush1.msra.mxu0 %v879
    %915 = vmatprep.subr.mxu0 0.0
    %916 = vmatpush1.msra.mxu0 %v878
    %917 = vmatprep.subr.mxu0 0.0
    %918 = vmatpush1.msra.mxu0 %v877
    %919 = vmatprep.subr.mxu0 0.0
    %920 = vmatpush1.msra.mxu0 %v876
    %921 = vmatprep.subr.mxu0 0.0
    %922 = vmatpush1.msra.mxu0 %v875
    %923 = vmatprep.subr.mxu0 0.0
    %924 = vmatpush2.msra.mxu0 0.0
    %925 = vmatprep.subr.mxu0 0.0
    %926 = vmatpush2.msra.mxu0 0.0
    %927 = vmatprep.subr.mxu0 0.0
    %928 = vmatpush2.msra.mxu0 0.0
    %929 = vmatprep.subr.mxu0 0.0
    %930 = vmatpush2.msra.mxu0 0.0
    %931 = vmatprep.subr.mxu0 0.0
    %932 = vmatpush2.msra.mxu0 0.0
    %933 = vmatprep.subr.mxu0 0.0
    %934 = vmatpush2.msra.mxu0 0.0
    %935 = vmatprep.subr.mxu0 0.0
    %936 = vmatpush2.msra.mxu0 0.0
    %937 = vmatprep.subr.mxu0 0.0
    %938 = vmatpush2.msra.mxu0 0.0
    %939 = vmatprep.subr.mxu0 0.0
    %940 = vmatpush2.msra.mxu0 0.0
    %941 = vmatprep.subr.mxu0 0.0
    %942 = vmatpush2.msra.mxu0 0.0
    %943 = vmatprep.subr.mxu0 0.0
    %944 = vmatpush2.msra.mxu0 0.0
    %945 = vmatprep.subr.mxu0 0.0
    %946 = vmatpush2.msra.mxu0 0.0
    %947 = vmatprep.subr.mxu0 0.0
    %948 = vmatpush2.msra.mxu0 0.0
    %949 = vmatprep.subr.mxu0 0.0
    %950 = vmatpush2.msra.mxu0 0.0
    %951 = vmatprep.subr.mxu0 0.0
    %952 = vmatpush2.msra.mxu0 0.0
    %953 = vmatprep.subr.mxu0 0.0
    %954 = vmatpush2.msra.mxu0 0.0
    %955 = vmatprep.mubr.f32.mxu0 0.0
    %956 = vmatmul.mubr.f32.gmra.mxu0 %v854
    %v957 = vpop.f32.mrf.mxu0
    %v958 = vadd.f32 0.0, %v957
    %v959 = vpop.f32.mrf.mxu0
    %960 = vmatprep.mubr.f32.mxu0 0.0
    %961 = vmatmul.mubr.f32.gmra.mxu0 %v856
    %v962 = vpop.f32.mrf.mxu0
    %v963 = vadd.f32 0.0, %v962
    %v964 = vpop.f32.mrf.mxu0
    %965 = vdwg.mxu0
    %966 = vmatprep.subr.mxu0 0.0
    %967 = vmatpush1.msra.mxu0 %v873
    %968 = vmatprep.subr.mxu0 0.0
    %969 = vmatpush1.msra.mxu0 %v872
    %970 = vmatprep.subr.mxu0 0.0
    %971 = vmatpush1.msra.mxu0 %v871
    %972 = vmatprep.subr.mxu0 0.0
    %973 = vmatpush1.msra.mxu0 %v870
    %974 = vmatprep.subr.mxu0 0.0
    %975 = vmatpush1.msra.mxu0 %v869
    %976 = vmatprep.subr.mxu0 0.0
    %977 = vmatpush1.msra.mxu0 %v868
    %978 = vmatprep.subr.mxu0 0.0
    %979 = vmatpush1.msra.mxu0 %v867
    %980 = vmatprep.subr.mxu0 0.0
    %981 = vmatpush1.msra.mxu0 %v866
    %982 = vmatprep.subr.mxu0 0.0
    %983 = vmatpush1.msra.mxu0 %v865
    %984 = vmatprep.subr.mxu0 0.0
    %985 = vmatpush1.msra.mxu0 %v864
    %986 = vmatprep.subr.mxu0 0.0
    %987 = vmatpush1.msra.mxu0 %v863
    %988 = vmatprep.subr.mxu0 0.0
    %989 = vmatpush1.msra.mxu0 %v862
    %990 = vmatprep.subr.mxu0 0.0
    %991 = vmatpush1.msra.mxu0 %v861
    %992 = vmatprep.subr.mxu0 0.0
    %993 = vmatpush1.msra.mxu0 %v860
    %994 = vmatprep.subr.mxu0 0.0
    %995 = vmatpush1.msra.mxu0 %v859
    %996 = vmatprep.subr.mxu0 0.0
    %997 = vmatpush1.msra.mxu0 %v858
    %998 = vmatprep.subr.mxu0 0.0
    %999 = vmatpush2.msra.mxu0 0.0
    %1000 = vmatprep.subr.mxu0 0.0
    %1001 = vmatpush2.msra.mxu0 0.0
    %1002 = vmatprep.subr.mxu0 0.0
    %1003 = vmatpush2.msra.mxu0 0.0
    %1004 = vmatprep.subr.mxu0 0.0
    %1005 = vmatpush2.msra.mxu0 0.0
    %1006 = vmatprep.subr.mxu0 0.0
    %1007 = vmatpush2.msra.mxu0 0.0
    %1008 = vmatprep.subr.mxu0 0.0
    %1009 = vmatpush2.msra.mxu0 0.0
    %1010 = vmatprep.subr.mxu0 0.0
    %1011 = vmatpush2.msra.mxu0 0.0
    %1012 = vmatprep.subr.mxu0 0.0
    %1013 = vmatpush2.msra.mxu0 0.0
    %1014 = vmatprep.subr.mxu0 0.0
    %1015 = vmatpush2.msra.mxu0 0.0
    %1016 = vmatprep.subr.mxu0 0.0
    %1017 = vmatpush2.msra.mxu0 0.0
    %1018 = vmatprep.subr.mxu0 0.0
    %1019 = vmatpush2.msra.mxu0 0.0
    %1020 = vmatprep.subr.mxu0 0.0
    %1021 = vmatpush2.msra.mxu0 0.0
    %1022 = vmatprep.subr.mxu0 0.0
    %1023 = vmatpush2.msra.mxu0 0.0
    %1024 = vmatprep.subr.mxu0 0.0
    %1025 = vmatpush2.msra.mxu0 0.0
    %1026 = vmatprep.subr.mxu0 0.0
    %1027 = vmatpush2.msra.mxu0 0.0
    %1028 = vmatprep.subr.mxu0 0.0
    %1029 = vmatpush2.msra.mxu0 0.0
    %1030 = vmatprep.mubr.f32.mxu0 0.0
    %1031 = vmatmul.mubr.f32.gmra.mxu0 %v846
    %v1032 = vpop.f32.mrf.mxu0
    %v1033 = vadd.f32 %v958, %v1032
    %v1034 = vpop.f32.mrf.mxu0
    %1035 = vmatprep.mubr.f32.mxu0 0.0
    %1036 = vmatmul.mubr.f32.gmra.mxu0 %v848
    %v1037 = vpop.f32.mrf.mxu0
    %v1038 = vadd.f32 %v963, %v1037
    %v1039 = vpop.f32.mrf.mxu0
    %1040 = vdwg.mxu0
    %1041 = vst [vmem:[#allocation12] sm:$0xff] %v1033
    %1042 = vst [vmem:[#allocation12 + $0x10] sm:$0xff] %v1038
    %1043 = vmatprep.subr.mxu0 0.0
    %1044 = vmatpush1.msra.mxu0 %v890
    %1045 = vmatprep.subr.mxu0 0.0
    %1046 = vmatpush1.msra.mxu0 %v889
    %1047 = vmatprep.subr.mxu0 0.0
    %1048 = vmatpush1.msra.mxu0 %v888
    %1049 = vmatprep.subr.mxu0 0.0
    %1050 = vmatpush1.msra.mxu0 %v887
    %1051 = vmatprep.subr.mxu0 0.0
    %1052 = vmatpush1.msra.mxu0 %v886
    %1053 = vmatprep.subr.mxu0 0.0
    %1054 = vmatpush1.msra.mxu0 %v885
    %1055 = vmatprep.subr.mxu0 0.0
    %1056 = vmatpush1.msra.mxu0 %v884
    %1057 = vmatprep.subr.mxu0 0.0
    %1058 = vmatpush1.msra.mxu0 %v883
    %1059 = vmatprep.subr.mxu0 0.0
    %1060 = vmatpush1.msra.mxu0 %v882
    %1061 = vmatprep.subr.mxu0 0.0
    %1062 = vmatpush1.msra.mxu0 %v881
    %1063 = vmatprep.subr.mxu0 0.0
    %1064 = vmatpush1.msra.mxu0 %v880
    %1065 = vmatprep.subr.mxu0 0.0
    %1066 = vmatpush1.msra.mxu0 %v879
    %1067 = vmatprep.subr.mxu0 0.0
    %1068 = vmatpush1.msra.mxu0 %v878
    %1069 = vmatprep.subr.mxu0 0.0
    %1070 = vmatpush1.msra.mxu0 %v877
    %1071 = vmatprep.subr.mxu0 0.0
    %1072 = vmatpush1.msra.mxu0 %v876
    %1073 = vmatprep.subr.mxu0 0.0
    %1074 = vmatpush1.msra.mxu0 %v875
    %1075 = vmatprep.subr.mxu0 0.0
    %1076 = vmatpush2.msra.mxu0 0.0
    %1077 = vmatprep.subr.mxu0 0.0
    %1078 = vmatpush2.msra.mxu0 0.0
    %1079 = vmatprep.subr.mxu0 0.0
    %1080 = vmatpush2.msra.mxu0 0.0
    %1081 = vmatprep.subr.mxu0 0.0
    %1082 = vmatpush2.msra.mxu0 0.0
    %1083 = vmatprep.subr.mxu0 0.0
    %1084 = vmatpush2.msra.mxu0 0.0
    %1085 = vmatprep.subr.mxu0 0.0
    %1086 = vmatpush2.msra.mxu0 0.0
    %1087 = vmatprep.subr.mxu0 0.0
    %1088 = vmatpush2.msra.mxu0 0.0
    %1089 = vmatprep.subr.mxu0 0.0
    %1090 = vmatpush2.msra.mxu0 0.0
    %1091 = vmatprep.subr.mxu0 0.0
    %1092 = vmatpush2.msra.mxu0 0.0
    %1093 = vmatprep.subr.mxu0 0.0
    %1094 = vmatpush2.msra.mxu0 0.0
    %1095 = vmatprep.subr.mxu0 0.0
    %1096 = vmatpush2.msra.mxu0 0.0
    %1097 = vmatprep.subr.mxu0 0.0
    %1098 = vmatpush2.msra.mxu0 0.0
    %1099 = vmatprep.subr.mxu0 0.0
    %1100 = vmatpush2.msra.mxu0 0.0
    %1101 = vmatprep.subr.mxu0 0.0
    %1102 = vmatpush2.msra.mxu0 0.0
    %1103 = vmatprep.subr.mxu0 0.0
    %1104 = vmatpush2.msra.mxu0 0.0
    %1105 = vmatprep.subr.mxu0 0.0
    %1106 = vmatpush2.msra.mxu0 0.0
    %1107 = vmatprep.mubr.f32.mxu0 0.0
    %1108 = vmatmul.mubr.f32.gmra.mxu0 %v855
    %v1109 = vpop.f32.mrf.mxu0
    %v1110 = vadd.f32 0.0, %v1109
    %v1111 = vpop.f32.mrf.mxu0
    %1112 = vmatprep.mubr.f32.mxu0 0.0
    %1113 = vmatmul.mubr.f32.gmra.mxu0 %v857
    %v1114 = vpop.f32.mrf.mxu0
    %v1115 = vadd.f32 0.0, %v1114
    %v1116 = vpop.f32.mrf.mxu0
    %1117 = vdwg.mxu0
    %1118 = vmatprep.subr.mxu0 0.0
    %1119 = vmatpush1.msra.mxu0 %v873
    %1120 = vmatprep.subr.mxu0 0.0
    %1121 = vmatpush1.msra.mxu0 %v872
    %1122 = vmatprep.subr.mxu0 0.0
    %1123 = vmatpush1.msra.mxu0 %v871
    %1124 = vmatprep.subr.mxu0 0.0
    %1125 = vmatpush1.msra.mxu0 %v870
    %1126 = vmatprep.subr.mxu0 0.0
    %1127 = vmatpush1.msra.mxu0 %v869
    %1128 = vmatprep.subr.mxu0 0.0
    %1129 = vmatpush1.msra.mxu0 %v868
    %1130 = vmatprep.subr.mxu0 0.0
    %1131 = vmatpush1.msra.mxu0 %v867
    %1132 = vmatprep.subr.mxu0 0.0
    %1133 = vmatpush1.msra.mxu0 %v866
    %1134 = vmatprep.subr.mxu0 0.0
    %1135 = vmatpush1.msra.mxu0 %v865
    %1136 = vmatprep.subr.mxu0 0.0
    %1137 = vmatpush1.msra.mxu0 %v864
    %1138 = vmatprep.subr.mxu0 0.0
    %1139 = vmatpush1.msra.mxu0 %v863
    %1140 = vmatprep.subr.mxu0 0.0
    %1141 = vmatpush1.msra.mxu0 %v862
    %1142 = vmatprep.subr.mxu0 0.0
    %1143 = vmatpush1.msra.mxu0 %v861
    %1144 = vmatprep.subr.mxu0 0.0
    %1145 = vmatpush1.msra.mxu0 %v860
    %1146 = vmatprep.subr.mxu0 0.0
    %1147 = vmatpush1.msra.mxu0 %v859
    %1148 = vmatprep.subr.mxu0 0.0
    %1149 = vmatpush1.msra.mxu0 %v858
    %1150 = vmatprep.subr.mxu0 0.0
    %1151 = vmatpush2.msra.mxu0 0.0
    %1152 = vmatprep.subr.mxu0 0.0
    %1153 = vmatpush2.msra.mxu0 0.0
    %1154 = vmatprep.subr.mxu0 0.0
    %1155 = vmatpush2.msra.mxu0 0.0
    %1156 = vmatprep.subr.mxu0 0.0
    %1157 = vmatpush2.msra.mxu0 0.0
    %1158 = vmatprep.subr.mxu0 0.0
    %1159 = vmatpush2.msra.mxu0 0.0
    %1160 = vmatprep.subr.mxu0 0.0
    %1161 = vmatpush2.msra.mxu0 0.0
    %1162 = vmatprep.subr.mxu0 0.0
    %1163 = vmatpush2.msra.mxu0 0.0
    %1164 = vmatprep.subr.mxu0 0.0
    %1165 = vmatpush2.msra.mxu0 0.0
    %1166 = vmatprep.subr.mxu0 0.0
    %1167 = vmatpush2.msra.mxu0 0.0
    %1168 = vmatprep.subr.mxu0 0.0
    %1169 = vmatpush2.msra.mxu0 0.0
    %1170 = vmatprep.subr.mxu0 0.0
    %1171 = vmatpush2.msra.mxu0 0.0
    %1172 = vmatprep.subr.mxu0 0.0
    %1173 = vmatpush2.msra.mxu0 0.0
    %1174 = vmatprep.subr.mxu0 0.0
    %1175 = vmatpush2.msra.mxu0 0.0
    %1176 = vmatprep.subr.mxu0 0.0
    %1177 = vmatpush2.msra.mxu0 0.0
    %1178 = vmatprep.subr.mxu0 0.0
    %1179 = vmatpush2.msra.mxu0 0.0
    %1180 = vmatprep.subr.mxu0 0.0
    %1181 = vmatpush2.msra.mxu0 0.0
    %1182 = vmatprep.mubr.f32.mxu0 0.0
    %1183 = vmatmul.mubr.f32.gmra.mxu0 %v847
    %v1184 = vpop.f32.mrf.mxu0
    %v1185 = vadd.f32 %v1110, %v1184
    %v1186 = vpop.f32.mrf.mxu0
    %1187 = vmatprep.mubr.f32.mxu0 0.0
    %1188 = vmatmul.mubr.f32.gmra.mxu0 %v849
    %v1189 = vpop.f32.mrf.mxu0
    %v1190 = vadd.f32 %v1115, %v1189
    %v1191 = vpop.f32.mrf.mxu0
    %1192 = vdwg.mxu0
    %1193 = vst [vmem:[#allocation12 + $0x8] sm:$0xff] %v1185
    %1194 = vst [vmem:[#allocation12 + $0x18] sm:$0xff] %v1190
    // Predicated region
    $region46: #{tpu_custom_call.1} parent=1 // pred_check
      _
    $region47: #{tpu_custom_call.1} parent=1 // pred_check_branch
      %1196 = sbr.rel (0) target = $region49
    $region48: #{tpu_custom_call.1} parent=1 // pred_region
      %s1198 = ssub.s32 512, 512
      %1199 = vsyncadd [#allocation5], %s1198
      %s1200 = sshll.u32 [#allocation12], 4
      %s1201 = int_to_ptr.vmem [resolvable:$true] %s1200
      %1206 = dma.vmem_to_hbm [thread:$0]  %s1201, 512, %s6, [#allocation5], 256, 256, 16
    $region49: #{tpu_custom_call.1} parent=1 // pred_fallthru
      _
    // Predicated region
    $region50: #{tpu_custom_call.1} parent=1 // pred_check
      _
    $region51: #{tpu_custom_call.1} parent=1 // pred_check_branch
      %1208 = sbr.rel (0) target = $region53
    $region52: #{tpu_custom_call.1} parent=1 // pred_region
      %1209 = dma.done [#allocation5], 512
    $region53: #{tpu_custom_call.1} parent=1 // pred_fallthru
      _
    %1210 = vsyncpa [#allocation4], 1
    %1211 = vsyncpa [#allocation7], 1
    %1212 = vsyncpa [#allocation10], 1
    %1213 = vsyncpa [#allocation5], 1

</llo_original>
